<compile_context>
chip_gen: v5e
topology: v5e:2x2
jax: 0.10.0
libtpu: 0.0.40
codegen_flags: <defaults>
</compile_context>

<pallas_src>
import functools
import math

import numpy as np
import jax
import jax.numpy as jnp
from jax import lax
from jax.experimental import pallas as pl
from jax.experimental.pallas import tpu as pltpu


# ----------------------------- model constants -----------------------------
VOCAB = 100
VOCAB_PAD = 128           # token table row-padded to 128 for the one-hot MXU gather
HIDDEN = 32
HEADS = 2
HEAD_DIM = HIDDEN // HEADS
LAYERS = 2
INTERMEDIATE = 64
MAX_POS = 16
CLASS_EMB = 16            # ClassEmbeddingsize
CLS_PAD = 128             # lane-dense classifier output width (sliced to C+1 in XLA)
BATCH = 2
SEQ = 8
LN_EPS = 1e-12


# --------------------------- fused Pallas kernel ----------------------------

def _layernorm(x, g, b):
    # One-pass statistics: var = E[x^2] - mu^2 (both reductions independent).
    mu = jnp.mean(x, axis=-1, keepdims=True)
    ms = jnp.mean(x * x, axis=-1, keepdims=True)
    var = ms - mu * mu
    return (x - mu) * lax.rsqrt(var + LN_EPS) * g + b


def _gelu(x):
    # TODO(synk): HF BERT uses exact erf GELU; tanh approximation kept for guaranteed Mosaic lowering.
    return 0.5 * x * (1.0 + jnp.tanh(0.7978845608028654 * (x + 0.044715 * x * x * x)))


def _fused_forward_kernel(
        ids_ref, tok_emb_ref, pos_emb_ref, type_emb_ref,
        emb_g_ref, emb_b_ref, mask_ref,
        wq_ref, wk_ref, wv_ref, bq_ref, bk_ref, bv_ref, wo_ref, bo_ref,
        ln1_g_ref, ln1_b_ref,
        wi_ref, bi_ref, wo2_ref, bo2_ref, ln2_g_ref, ln2_b_ref,
        sel_ref, pool_w_ref, pool_b_ref, cls_w_ref, cls_b_ref,
        out_ref, *, batch, seq, heads, layers):
    m = batch * seq                          # token rows
    hidden = wq_ref.shape[1]
    vocab_pad = tok_emb_ref.shape[0]

    # ---- embedding lookup inside the kernel: one-hot MXU gather ----
    one_hot = jnp.where(
        lax.broadcasted_iota(jnp.int32, (m, vocab_pad), 1) == ids_ref[...],
        1.0, 0.0)
    tok = jnp.dot(one_hot, tok_emb_ref[...], preferred_element_type=jnp.float32)
    pos = pos_emb_ref[0:seq, :]                                   # (S, H) static slice
    x = tok + jnp.concatenate([pos] * batch, axis=0) + type_emb_ref[0:1, :]
    x = _layernorm(x, emb_g_ref[...], emb_b_ref[...])

    mask_bias = mask_ref[...]                 # additive {0, -1e30} block-diagonal bias

    for l in range(layers):                   # tiny model: unrolled, weights resident in VMEM
        ctx_proj = jnp.zeros((m, hidden), jnp.float32)
        for h in range(heads):
            idx = l * heads + h               # static leading-dim index (zero-cost view)
            q = jnp.dot(x, wq_ref[idx], preferred_element_type=jnp.float32) + bq_ref[idx]
            k = jnp.dot(x, wk_ref[idx], preferred_element_type=jnp.float32) + bk_ref[idx]
            v = jnp.dot(x, wv_ref[idx], preferred_element_type=jnp.float32) + bv_ref[idx]
            # scale is pre-folded into wq/bq on the host
            s = lax.dot_general(q, k, (((1,), (1,)), ((), ())),
                                preferred_element_type=jnp.float32) + mask_bias
            s = s - jnp.max(s, axis=-1, keepdims=True)
            p = jnp.exp(s)
            p = p * pl.reciprocal(jnp.sum(p, axis=-1, keepdims=True), approx=True)
            ctx = jnp.dot(p, v, preferred_element_type=jnp.float32)
            ctx_proj = ctx_proj + jnp.dot(ctx, wo_ref[idx],
                                          preferred_element_type=jnp.float32)
        x = _layernorm(ctx_proj + bo_ref[l] + x, ln1_g_ref[l], ln1_b_ref[l])

        # ---- feed-forward ----
        h1 = _gelu(jnp.dot(x, wi_ref[l], preferred_element_type=jnp.float32) + bi_ref[l])
        h2 = jnp.dot(h1, wo2_ref[l], preferred_element_type=jnp.float32) + bo2_ref[l]
        x = _layernorm(h2 + x, ln2_g_ref[l], ln2_b_ref[l])

    # ---- pooler + classifier on the [CLS] rows only (selected by a tiny matmul) ----
    x_cls = jnp.dot(sel_ref[...], x, preferred_element_type=jnp.float32)      # (8, H)
    pooled = jnp.tanh(jnp.dot(x_cls, pool_w_ref[...], preferred_element_type=jnp.float32)
                      + pool_b_ref[...])
    # pad(pooled, (0,1), value=1) @ W  ==  pooled @ W[:H] + W[H]  (W pre-split on host)
    out_ref[...] = (jnp.dot(pooled, cls_w_ref[...], preferred_element_type=jnp.float32)
                    + cls_b_ref[...])


def fused_forward(ids, params, *, batch, seq):
    m = batch * seq
    out_rows = max(8, ((batch + 7) // 8) * 8)

    # Trace-time (numpy) constants: block-diagonal additive mask and [CLS]-row selector.
    rows = np.arange(m)
    mask = np.where((rows[:, None] // seq) == (rows[None, :] // seq),
                    0.0, -1e30).astype(np.float32)
    sel = np.zeros((out_rows, m), np.float32)
    sel[np.arange(batch), np.arange(batch) * seq] = 1.0

    kernel = functools.partial(_fused_forward_kernel, batch=batch, seq=seq,
                               heads=HEADS, layers=LAYERS)
    args = (
        ids,
        params["tok_emb"], params["pos_emb"], params["type_emb"],
        params["emb_ln_g"], params["emb_ln_b"], jnp.asarray(mask),
        params["wq"], params["wk"], params["wv"],
        params["bq"], params["bk"], params["bv"],
        params["wo"], params["bo"],
        params["ln1_g"], params["ln1_b"],
        params["wi"], params["bi"], params["wo2"], params["bo2"],
        params["ln2_g"], params["ln2_b"],
        jnp.asarray(sel), params["pool_w"], params["pool_b"],
        params["cls_w"], params["cls_b"],
    )
    vmem = pl.BlockSpec(memory_space=pltpu.MemorySpace.VMEM)
    return pl.pallas_call(
        kernel,
        out_shape=jax.ShapeDtypeStruct((out_rows, CLS_PAD), jnp.float32),
        in_specs=[vmem] * len(args),
        out_specs=vmem,
        compiler_params=pltpu.CompilerParams(vmem_limit_bytes=32 * 1024 * 1024),
    )(*args)


# --------------------------- synthetic tiny BERT ---------------------------

def init_params(key):
    def nrm(k, shape, scale=0.02):
        return jax.random.normal(k, shape, jnp.float32) * scale

    keys = iter(jax.random.split(key, 64))
    p = {
        "tok_emb": jnp.pad(nrm(next(keys), (VOCAB, HIDDEN)),
                           ((0, VOCAB_PAD - VOCAB), (0, 0))),      # row-pad for one-hot gather
        "pos_emb": nrm(next(keys), (MAX_POS, HIDDEN)),
        "type_emb": nrm(next(keys), (2, HIDDEN)),
        "emb_ln_g": jnp.ones((1, HIDDEN), jnp.float32),
        "emb_ln_b": jnp.zeros((1, HIDDEN), jnp.float32),
        "pool_w": nrm(next(keys), (HIDDEN, HIDDEN)),
        "pool_b": jnp.zeros((1, HIDDEN), jnp.float32),
    }

    scale = 1.0 / math.sqrt(HEAD_DIM)
    wq_l, wk_l, wv_l, wo_l = [], [], [], []
    bq_l, bk_l, bv_l = [], [], []
    bo_l, ln1g, ln1b, wi_l, bi_l, wo2_l, bo2_l, ln2g, ln2b = ([] for _ in range(9))
    for _ in range(LAYERS):
        wq = nrm(next(keys), (HIDDEN, HIDDEN)) * scale             # 1/sqrt(d) folded into Q
        wk = nrm(next(keys), (HIDDEN, HIDDEN))
        wv = nrm(next(keys), (HIDDEN, HIDDEN))
        wo = nrm(next(keys), (HIDDEN, HIDDEN))
        for h in range(HEADS):                                     # per-head pre-split weights
            c0, c1 = h * HEAD_DIM, (h + 1) * HEAD_DIM
            wq_l.append(wq[:, c0:c1])
            wk_l.append(wk[:, c0:c1])
            wv_l.append(wv[:, c0:c1])
            wo_l.append(wo[c0:c1, :])
            bq_l.append(jnp.zeros((1, HEAD_DIM), jnp.float32))     # (scale-folded, zero)
            bk_l.append(jnp.zeros((1, HEAD_DIM), jnp.float32))
            bv_l.append(jnp.zeros((1, HEAD_DIM), jnp.float32))
        bo_l.append(jnp.zeros((1, HIDDEN), jnp.float32))
        ln1g.append(jnp.ones((1, HIDDEN), jnp.float32))
        ln1b.append(jnp.zeros((1, HIDDEN), jnp.float32))
        wi_l.append(nrm(next(keys), (HIDDEN, INTERMEDIATE)))
        bi_l.append(jnp.zeros((1, INTERMEDIATE), jnp.float32))
        wo2_l.append(nrm(next(keys), (INTERMEDIATE, HIDDEN)))
        bo2_l.append(jnp.zeros((1, HIDDEN), jnp.float32))
        ln2g.append(jnp.ones((1, HIDDEN), jnp.float32))
        ln2b.append(jnp.zeros((1, HIDDEN), jnp.float32))

    for name, vals in [("wq", wq_l), ("wk", wk_l), ("wv", wv_l),
                       ("bq", bq_l), ("bk", bk_l), ("bv", bv_l), ("wo", wo_l)]:
        p[name] = jnp.stack(vals, axis=0)                          # (LAYERS*HEADS, ...)
    for name, vals in [("bo", bo_l), ("ln1_g", ln1g), ("ln1_b", ln1b),
                       ("wi", wi_l), ("bi", bi_l), ("wo2", wo2_l), ("bo2", bo2_l),
                       ("ln2_g", ln2g), ("ln2_b", ln2b)]:
        p[name] = jnp.stack(vals, axis=0)                          # (LAYERS, ...)

    # self.W = rand(H+1, ClassEmbeddingsize+1) * 0.05 — pre-split into matrix + bias row
    # and lane-pad the class dimension to 128 so the kernel's only store is unmasked.
    W = jax.random.uniform(next(keys), (HIDDEN + 1, CLASS_EMB + 1), jnp.float32) * 0.05
    pad = CLS_PAD - (CLASS_EMB + 1)
    p["cls_w"] = jnp.pad(W[:HIDDEN, :], ((0, 0), (0, pad)))
    p["cls_b"] = jnp.pad(W[HIDDEN:HIDDEN + 1, :], ((0, 0), (0, pad)))
    return p


def transformer_lstm_forward(params, X):
    # config.HF_ONLY_ID=True: X is input_ids, attention_mask=None.
    X_input = X.reshape(X.shape[0], -1)
    B, S = X_input.shape
    ids = X_input.reshape(B * S, 1).astype(jnp.int32)              # gathered inside the kernel
    full = fused_forward(ids, params, batch=B, seq=S)              # (8, 128) lane-dense slab
    # [CLS] rows are already the first B rows; keep the real classifier columns (C+1 = 17).
    return full[:B, :CLASS_EMB + 1]


# ----------------------------------- main -----------------------------------

if __name__ == "__main__":
    key = jax.random.PRNGKey(0)
    k_params, k_ids = jax.random.split(key)
    params = init_params(k_params)
    input_ids = jax.random.randint(k_ids, (BATCH, SEQ), 0, VOCAB, dtype=jnp.int32)

    out = jax.jit(transformer_lstm_forward)(params, input_ids)
    out = jax.block_until_ready(out)
    assert out.shape == (BATCH, CLASS_EMB + 1), out.shape
    assert bool(jnp.all(jnp.isfinite(out)))
    print("KERNEL_OK")
</pallas_src>

<mosaic_0001>
module attributes {stable_mosaic.version = 11 : i64} {
  func.func @_fused_forward_kernel(%arg0: memref<16x1xi32, #tpu.memory_space<vmem>>, %arg1: memref<128x32xf32, #tpu.memory_space<vmem>>, %arg2: memref<16x32xf32, #tpu.memory_space<vmem>>, %arg3: memref<2x32xf32, #tpu.memory_space<vmem>>, %arg4: memref<1x32xf32, #tpu.memory_space<vmem>>, %arg5: memref<1x32xf32, #tpu.memory_space<vmem>>, %arg6: memref<16x16xf32, #tpu.memory_space<vmem>>, %arg7: memref<4x32x16xf32, #tpu.memory_space<vmem>>, %arg8: memref<4x32x16xf32, #tpu.memory_space<vmem>>, %arg9: memref<4x32x16xf32, #tpu.memory_space<vmem>>, %arg10: memref<4x1x16xf32, #tpu.memory_space<vmem>>, %arg11: memref<4x1x16xf32, #tpu.memory_space<vmem>>, %arg12: memref<4x1x16xf32, #tpu.memory_space<vmem>>, %arg13: memref<4x16x32xf32, #tpu.memory_space<vmem>>, %arg14: memref<2x1x32xf32, #tpu.memory_space<vmem>>, %arg15: memref<2x1x32xf32, #tpu.memory_space<vmem>>, %arg16: memref<2x1x32xf32, #tpu.memory_space<vmem>>, %arg17: memref<2x32x64xf32, #tpu.memory_space<vmem>>, %arg18: memref<2x1x64xf32, #tpu.memory_space<vmem>>, %arg19: memref<2x64x32xf32, #tpu.memory_space<vmem>>, %arg20: memref<2x1x32xf32, #tpu.memory_space<vmem>>, %arg21: memref<2x1x32xf32, #tpu.memory_space<vmem>>, %arg22: memref<2x1x32xf32, #tpu.memory_space<vmem>>, %arg23: memref<8x16xf32, #tpu.memory_space<vmem>>, %arg24: memref<32x32xf32, #tpu.memory_space<vmem>>, %arg25: memref<1x32xf32, #tpu.memory_space<vmem>>, %arg26: memref<32x128xf32, #tpu.memory_space<vmem>>, %arg27: memref<1x128xf32, #tpu.memory_space<vmem>>, %arg28: memref<8x128xf32, #tpu.memory_space<vmem>>) attributes {dimension_semantics = [], scalar_prefetch = 0 : i64, scratch_operands = 0 : i64, tpu.core_type = #tpu.core_type<tc>} {
    %0 = tpu.iota {dimensions = array<i32: 1>} : vector<16x128xi32>
    %c0 = arith.constant 0 : index
    %c0_0 = arith.constant 0 : index
    %1 = vector.load %arg0[%c0, %c0_0] : memref<16x1xi32, #tpu.memory_space<vmem>>, vector<16x1xi32>
    %2 = vector.broadcast %1 : vector<16x1xi32> to vector<16x128xi32>
    %3 = arith.cmpi eq, %0, %2 : vector<16x128xi32>
    %cst = arith.constant 1.000000e+00 : f32
    %cst_1 = arith.constant 0.000000e+00 : f32
    %4 = vector.broadcast %cst : f32 to vector<16x128xf32>
    %5 = vector.broadcast %cst_1 : f32 to vector<16x128xf32>
    %6 = arith.select %3, %4, %5 : vector<16x128xi1>, vector<16x128xf32>
    %c0_2 = arith.constant 0 : index
    %c0_3 = arith.constant 0 : index
    %7 = vector.load %arg1[%c0_2, %c0_3] : memref<128x32xf32, #tpu.memory_space<vmem>>, vector<128x32xf32>
    %cst_4 = arith.constant dense<0.000000e+00> : vector<16x32xf32>
    %8 = tpu.matmul %6, %7, %cst_4 {dimension_numbers = #tpu.dot_dimension_numbers<[1], [0], [0], [1], [0, 0, 1, 1], [], []>} : vector<16x128xf32>, vector<128x32xf32>, vector<16x32xf32> -> vector<16x32xf32>
    %c0_5 = arith.constant 0 : index
    %c0_6 = arith.constant 0 : index
    %9 = vector.load %arg2[%c0_5, %c0_6] : memref<16x32xf32, #tpu.memory_space<vmem>>, vector<8x32xf32>
    %10 = tpu.concatenate %9, %9 in 0 : vector<8x32xf32>, vector<8x32xf32> -> vector<16x32xf32>
    %11 = arith.addf %8, %10 : vector<16x32xf32>
    %c0_7 = arith.constant 0 : index
    %c0_8 = arith.constant 0 : index
    %12 = vector.load %arg3[%c0_7, %c0_8] : memref<2x32xf32, #tpu.memory_space<vmem>>, vector<1x32xf32>
    %13 = vector.broadcast %12 : vector<1x32xf32> to vector<16x32xf32>
    %14 = arith.addf %11, %13 : vector<16x32xf32>
    %c0_9 = arith.constant 0 : index
    %c0_10 = arith.constant 0 : index
    %15 = vector.load %arg4[%c0_9, %c0_10] : memref<1x32xf32, #tpu.memory_space<vmem>>, vector<1x32xf32>
    %c0_11 = arith.constant 0 : index
    %c0_12 = arith.constant 0 : index
    %16 = vector.load %arg5[%c0_11, %c0_12] : memref<1x32xf32, #tpu.memory_space<vmem>>, vector<1x32xf32>
    %cst_13 = arith.constant dense<0.000000e+00> : vector<16xf32>
    %17 = vector.multi_reduction <add>, %14, %cst_13 [1] : vector<16x32xf32> to vector<16xf32>
    %18 = vector.shape_cast %17 : vector<16xf32> to vector<16x1xf32>
    %cst_14 = arith.constant 3.200000e+01 : f32
    %19 = vector.broadcast %cst_14 : f32 to vector<16x1xf32>
    %20 = arith.divf %18, %19 : vector<16x1xf32>
    %21 = arith.mulf %14, %14 : vector<16x32xf32>
    %cst_15 = arith.constant dense<0.000000e+00> : vector<16xf32>
    %22 = vector.multi_reduction <add>, %21, %cst_15 [1] : vector<16x32xf32> to vector<16xf32>
    %23 = vector.shape_cast %22 : vector<16xf32> to vector<16x1xf32>
    %cst_16 = arith.constant 3.200000e+01 : f32
    %24 = vector.broadcast %cst_16 : f32 to vector<16x1xf32>
    %25 = arith.divf %23, %24 : vector<16x1xf32>
    %26 = arith.mulf %20, %20 : vector<16x1xf32>
    %27 = arith.subf %25, %26 : vector<16x1xf32>
    %28 = vector.broadcast %20 : vector<16x1xf32> to vector<16x32xf32>
    %29 = arith.subf %14, %28 : vector<16x32xf32>
    %cst_17 = arith.constant 9.99999996E-13 : f32
    %30 = vector.broadcast %cst_17 : f32 to vector<16x1xf32>
    %31 = arith.addf %27, %30 : vector<16x1xf32>
    %32 = math.rsqrt %31 : vector<16x1xf32>
    %33 = vector.broadcast %32 : vector<16x1xf32> to vector<16x32xf32>
    %34 = arith.mulf %29, %33 : vector<16x32xf32>
    %35 = vector.broadcast %15 : vector<1x32xf32> to vector<16x32xf32>
    %36 = arith.mulf %34, %35 : vector<16x32xf32>
    %37 = vector.broadcast %16 : vector<1x32xf32> to vector<16x32xf32>
    %38 = arith.addf %36, %37 : vector<16x32xf32>
    %c0_18 = arith.constant 0 : index
    %c0_19 = arith.constant 0 : index
    %39 = vector.load %arg6[%c0_18, %c0_19] : memref<16x16xf32, #tpu.memory_space<vmem>>, vector<16x16xf32>
    %cst_20 = arith.constant 0.000000e+00 : f32
    %40 = vector.broadcast %cst_20 : f32 to vector<16x32xf32>
    %c0_21 = arith.constant 0 : index
    %c0_22 = arith.constant 0 : index
    %c0_23 = arith.constant 0 : index
    %41 = vector.load %arg7[%c0_21, %c0_22, %c0_23] : memref<4x32x16xf32, #tpu.memory_space<vmem>>, vector<1x32x16xf32>
    %42 = vector.shape_cast %41 : vector<1x32x16xf32> to vector<32x16xf32>
    %cst_24 = arith.constant dense<0.000000e+00> : vector<16x16xf32>
    %43 = tpu.matmul %38, %42, %cst_24 {dimension_numbers = #tpu.dot_dimension_numbers<[1], [0], [0], [1], [0, 0, 1, 1], [], []>} : vector<16x32xf32>, vector<32x16xf32>, vector<16x16xf32> -> vector<16x16xf32>
    %c0_25 = arith.constant 0 : index
    %c0_26 = arith.constant 0 : index
    %c0_27 = arith.constant 0 : index
    %44 = vector.load %arg10[%c0_25, %c0_26, %c0_27] : memref<4x1x16xf32, #tpu.memory_space<vmem>>, vector<1x1x16xf32>
    %45 = vector.shape_cast %44 : vector<1x1x16xf32> to vector<1x16xf32>
    %46 = vector.broadcast %45 : vector<1x16xf32> to vector<16x16xf32>
    %47 = arith.addf %43, %46 : vector<16x16xf32>
    %c0_28 = arith.constant 0 : index
    %c0_29 = arith.constant 0 : index
    %c0_30 = arith.constant 0 : index
    %48 = vector.load %arg8[%c0_28, %c0_29, %c0_30] : memref<4x32x16xf32, #tpu.memory_space<vmem>>, vector<1x32x16xf32>
    %49 = vector.shape_cast %48 : vector<1x32x16xf32> to vector<32x16xf32>
    %cst_31 = arith.constant dense<0.000000e+00> : vector<16x16xf32>
    %50 = tpu.matmul %38, %49, %cst_31 {dimension_numbers = #tpu.dot_dimension_numbers<[1], [0], [0], [1], [0, 0, 1, 1], [], []>} : vector<16x32xf32>, vector<32x16xf32>, vector<16x16xf32> -> vector<16x16xf32>
    %c0_32 = arith.constant 0 : index
    %c0_33 = arith.constant 0 : index
    %c0_34 = arith.constant 0 : index
    %51 = vector.load %arg11[%c0_32, %c0_33, %c0_34] : memref<4x1x16xf32, #tpu.memory_space<vmem>>, vector<1x1x16xf32>
    %52 = vector.shape_cast %51 : vector<1x1x16xf32> to vector<1x16xf32>
    %53 = vector.broadcast %52 : vector<1x16xf32> to vector<16x16xf32>
    %54 = arith.addf %50, %53 : vector<16x16xf32>
    %c0_35 = arith.constant 0 : index
    %c0_36 = arith.constant 0 : index
    %c0_37 = arith.constant 0 : index
    %55 = vector.load %arg9[%c0_35, %c0_36, %c0_37] : memref<4x32x16xf32, #tpu.memory_space<vmem>>, vector<1x32x16xf32>
    %56 = vector.shape_cast %55 : vector<1x32x16xf32> to vector<32x16xf32>
    %cst_38 = arith.constant dense<0.000000e+00> : vector<16x16xf32>
    %57 = tpu.matmul %38, %56, %cst_38 {dimension_numbers = #tpu.dot_dimension_numbers<[1], [0], [0], [1], [0, 0, 1, 1], [], []>} : vector<16x32xf32>, vector<32x16xf32>, vector<16x16xf32> -> vector<16x16xf32>
    %c0_39 = arith.constant 0 : index
    %c0_40 = arith.constant 0 : index
    %c0_41 = arith.constant 0 : index
    %58 = vector.load %arg12[%c0_39, %c0_40, %c0_41] : memref<4x1x16xf32, #tpu.memory_space<vmem>>, vector<1x1x16xf32>
    %59 = vector.shape_cast %58 : vector<1x1x16xf32> to vector<1x16xf32>
    %60 = vector.broadcast %59 : vector<1x16xf32> to vector<16x16xf32>
    %61 = arith.addf %57, %60 : vector<16x16xf32>
    %cst_42 = arith.constant dense<0.000000e+00> : vector<16x16xf32>
    %62 = tpu.matmul %47, %54, %cst_42 {dimension_numbers = #tpu.dot_dimension_numbers<[1], [1], [0], [0], [0, 0, 1, 0], [], []>} : vector<16x16xf32>, vector<16x16xf32>, vector<16x16xf32> -> vector<16x16xf32>
    %63 = arith.addf %62, %39 : vector<16x16xf32>
    %cst_43 = arith.constant dense<0xFF800000> : vector<16xf32>
    %64 = vector.multi_reduction <maximumf>, %63, %cst_43 [1] : vector<16x16xf32> to vector<16xf32>
    %65 = vector.shape_cast %64 : vector<16xf32> to vector<16x1xf32>
    %66 = vector.broadcast %65 : vector<16x1xf32> to vector<16x16xf32>
    %67 = arith.subf %63, %66 : vector<16x16xf32>
    %68 = math.exp %67 : vector<16x16xf32>
    %cst_44 = arith.constant dense<0.000000e+00> : vector<16xf32>
    %69 = vector.multi_reduction <add>, %68, %cst_44 [1] : vector<16x16xf32> to vector<16xf32>
    %70 = vector.shape_cast %69 : vector<16xf32> to vector<16x1xf32>
    %71 = tpu.reciprocal %70 {approx = true} : vector<16x1xf32> -> vector<16x1xf32>
    %72 = vector.broadcast %71 : vector<16x1xf32> to vector<16x16xf32>
    %73 = arith.mulf %68, %72 : vector<16x16xf32>
    %cst_45 = arith.constant dense<0.000000e+00> : vector<16x16xf32>
    %74 = tpu.matmul %73, %61, %cst_45 {dimension_numbers = #tpu.dot_dimension_numbers<[1], [0], [0], [1], [0, 0, 1, 1], [], []>} : vector<16x16xf32>, vector<16x16xf32>, vector<16x16xf32> -> vector<16x16xf32>
    %c0_46 = arith.constant 0 : index
    %c0_47 = arith.constant 0 : index
    %c0_48 = arith.constant 0 : index
    %75 = vector.load %arg13[%c0_46, %c0_47, %c0_48] : memref<4x16x32xf32, #tpu.memory_space<vmem>>, vector<1x16x32xf32>
    %76 = vector.shape_cast %75 : vector<1x16x32xf32> to vector<16x32xf32>
    %cst_49 = arith.constant dense<0.000000e+00> : vector<16x32xf32>
    %77 = tpu.matmul %74, %76, %cst_49 {dimension_numbers = #tpu.dot_dimension_numbers<[1], [0], [0], [1], [0, 0, 1, 1], [], []>} : vector<16x16xf32>, vector<16x32xf32>, vector<16x32xf32> -> vector<16x32xf32>
    %78 = arith.addf %40, %77 : vector<16x32xf32>
    %c1 = arith.constant 1 : index
    %c0_50 = arith.constant 0 : index
    %c0_51 = arith.constant 0 : index
    %79 = vector.load %arg7[%c1, %c0_50, %c0_51] : memref<4x32x16xf32, #tpu.memory_space<vmem>>, vector<1x32x16xf32>
    %80 = vector.shape_cast %79 : vector<1x32x16xf32> to vector<32x16xf32>
    %cst_52 = arith.constant dense<0.000000e+00> : vector<16x16xf32>
    %81 = tpu.matmul %38, %80, %cst_52 {dimension_numbers = #tpu.dot_dimension_numbers<[1], [0], [0], [1], [0, 0, 1, 1], [], []>} : vector<16x32xf32>, vector<32x16xf32>, vector<16x16xf32> -> vector<16x16xf32>
    %c1_53 = arith.constant 1 : index
    %c0_54 = arith.constant 0 : index
    %c0_55 = arith.constant 0 : index
    %82 = vector.load %arg10[%c1_53, %c0_54, %c0_55] : memref<4x1x16xf32, #tpu.memory_space<vmem>>, vector<1x1x16xf32>
    %83 = vector.shape_cast %82 : vector<1x1x16xf32> to vector<1x16xf32>
    %84 = vector.broadcast %83 : vector<1x16xf32> to vector<16x16xf32>
    %85 = arith.addf %81, %84 : vector<16x16xf32>
    %c1_56 = arith.constant 1 : index
    %c0_57 = arith.constant 0 : index
    %c0_58 = arith.constant 0 : index
    %86 = vector.load %arg8[%c1_56, %c0_57, %c0_58] : memref<4x32x16xf32, #tpu.memory_space<vmem>>, vector<1x32x16xf32>
    %87 = vector.shape_cast %86 : vector<1x32x16xf32> to vector<32x16xf32>
    %cst_59 = arith.constant dense<0.000000e+00> : vector<16x16xf32>
    %88 = tpu.matmul %38, %87, %cst_59 {dimension_numbers = #tpu.dot_dimension_numbers<[1], [0], [0], [1], [0, 0, 1, 1], [], []>} : vector<16x32xf32>, vector<32x16xf32>, vector<16x16xf32> -> vector<16x16xf32>
    %c1_60 = arith.constant 1 : index
    %c0_61 = arith.constant 0 : index
    %c0_62 = arith.constant 0 : index
    %89 = vector.load %arg11[%c1_60, %c0_61, %c0_62] : memref<4x1x16xf32, #tpu.memory_space<vmem>>, vector<1x1x16xf32>
    %90 = vector.shape_cast %89 : vector<1x1x16xf32> to vector<1x16xf32>
    %91 = vector.broadcast %90 : vector<1x16xf32> to vector<16x16xf32>
    %92 = arith.addf %88, %91 : vector<16x16xf32>
    %c1_63 = arith.constant 1 : index
    %c0_64 = arith.constant 0 : index
    %c0_65 = arith.constant 0 : index
    %93 = vector.load %arg9[%c1_63, %c0_64, %c0_65] : memref<4x32x16xf32, #tpu.memory_space<vmem>>, vector<1x32x16xf32>
    %94 = vector.shape_cast %93 : vector<1x32x16xf32> to vector<32x16xf32>
    %cst_66 = arith.constant dense<0.000000e+00> : vector<16x16xf32>
    %95 = tpu.matmul %38, %94, %cst_66 {dimension_numbers = #tpu.dot_dimension_numbers<[1], [0], [0], [1], [0, 0, 1, 1], [], []>} : vector<16x32xf32>, vector<32x16xf32>, vector<16x16xf32> -> vector<16x16xf32>
    %c1_67 = arith.constant 1 : index
    %c0_68 = arith.constant 0 : index
    %c0_69 = arith.constant 0 : index
    %96 = vector.load %arg12[%c1_67, %c0_68, %c0_69] : memref<4x1x16xf32, #tpu.memory_space<vmem>>, vector<1x1x16xf32>
    %97 = vector.shape_cast %96 : vector<1x1x16xf32> to vector<1x16xf32>
    %98 = vector.broadcast %97 : vector<1x16xf32> to vector<16x16xf32>
    %99 = arith.addf %95, %98 : vector<16x16xf32>
    %cst_70 = arith.constant dense<0.000000e+00> : vector<16x16xf32>
    %100 = tpu.matmul %85, %92, %cst_70 {dimension_numbers = #tpu.dot_dimension_numbers<[1], [1], [0], [0], [0, 0, 1, 0], [], []>} : vector<16x16xf32>, vector<16x16xf32>, vector<16x16xf32> -> vector<16x16xf32>
    %101 = arith.addf %100, %39 : vector<16x16xf32>
    %cst_71 = arith.constant dense<0xFF800000> : vector<16xf32>
    %102 = vector.multi_reduction <maximumf>, %101, %cst_71 [1] : vector<16x16xf32> to vector<16xf32>
    %103 = vector.shape_cast %102 : vector<16xf32> to vector<16x1xf32>
    %104 = vector.broadcast %103 : vector<16x1xf32> to vector<16x16xf32>
    %105 = arith.subf %101, %104 : vector<16x16xf32>
    %106 = math.exp %105 : vector<16x16xf32>
    %cst_72 = arith.constant dense<0.000000e+00> : vector<16xf32>
    %107 = vector.multi_reduction <add>, %106, %cst_72 [1] : vector<16x16xf32> to vector<16xf32>
    %108 = vector.shape_cast %107 : vector<16xf32> to vector<16x1xf32>
    %109 = tpu.reciprocal %108 {approx = true} : vector<16x1xf32> -> vector<16x1xf32>
    %110 = vector.broadcast %109 : vector<16x1xf32> to vector<16x16xf32>
    %111 = arith.mulf %106, %110 : vector<16x16xf32>
    %cst_73 = arith.constant dense<0.000000e+00> : vector<16x16xf32>
    %112 = tpu.matmul %111, %99, %cst_73 {dimension_numbers = #tpu.dot_dimension_numbers<[1], [0], [0], [1], [0, 0, 1, 1], [], []>} : vector<16x16xf32>, vector<16x16xf32>, vector<16x16xf32> -> vector<16x16xf32>
    %c1_74 = arith.constant 1 : index
    %c0_75 = arith.constant 0 : index
    %c0_76 = arith.constant 0 : index
    %113 = vector.load %arg13[%c1_74, %c0_75, %c0_76] : memref<4x16x32xf32, #tpu.memory_space<vmem>>, vector<1x16x32xf32>
    %114 = vector.shape_cast %113 : vector<1x16x32xf32> to vector<16x32xf32>
    %cst_77 = arith.constant dense<0.000000e+00> : vector<16x32xf32>
    %115 = tpu.matmul %112, %114, %cst_77 {dimension_numbers = #tpu.dot_dimension_numbers<[1], [0], [0], [1], [0, 0, 1, 1], [], []>} : vector<16x16xf32>, vector<16x32xf32>, vector<16x32xf32> -> vector<16x32xf32>
    %116 = arith.addf %78, %115 : vector<16x32xf32>
    %c0_78 = arith.constant 0 : index
    %c0_79 = arith.constant 0 : index
    %c0_80 = arith.constant 0 : index
    %117 = vector.load %arg14[%c0_78, %c0_79, %c0_80] : memref<2x1x32xf32, #tpu.memory_space<vmem>>, vector<1x1x32xf32>
    %118 = vector.shape_cast %117 : vector<1x1x32xf32> to vector<1x32xf32>
    %119 = vector.broadcast %118 : vector<1x32xf32> to vector<16x32xf32>
    %120 = arith.addf %116, %119 : vector<16x32xf32>
    %121 = arith.addf %120, %38 : vector<16x32xf32>
    %c0_81 = arith.constant 0 : index
    %c0_82 = arith.constant 0 : index
    %c0_83 = arith.constant 0 : index
    %122 = vector.load %arg15[%c0_81, %c0_82, %c0_83] : memref<2x1x32xf32, #tpu.memory_space<vmem>>, vector<1x1x32xf32>
    %123 = vector.shape_cast %122 : vector<1x1x32xf32> to vector<1x32xf32>
    %c0_84 = arith.constant 0 : index
    %c0_85 = arith.constant 0 : index
    %c0_86 = arith.constant 0 : index
    %124 = vector.load %arg16[%c0_84, %c0_85, %c0_86] : memref<2x1x32xf32, #tpu.memory_space<vmem>>, vector<1x1x32xf32>
    %125 = vector.shape_cast %124 : vector<1x1x32xf32> to vector<1x32xf32>
    %cst_87 = arith.constant dense<0.000000e+00> : vector<16xf32>
    %126 = vector.multi_reduction <add>, %121, %cst_87 [1] : vector<16x32xf32> to vector<16xf32>
    %127 = vector.shape_cast %126 : vector<16xf32> to vector<16x1xf32>
    %cst_88 = arith.constant 3.200000e+01 : f32
    %128 = vector.broadcast %cst_88 : f32 to vector<16x1xf32>
    %129 = arith.divf %127, %128 : vector<16x1xf32>
    %130 = arith.mulf %121, %121 : vector<16x32xf32>
    %cst_89 = arith.constant dense<0.000000e+00> : vector<16xf32>
    %131 = vector.multi_reduction <add>, %130, %cst_89 [1] : vector<16x32xf32> to vector<16xf32>
    %132 = vector.shape_cast %131 : vector<16xf32> to vector<16x1xf32>
    %cst_90 = arith.constant 3.200000e+01 : f32
    %133 = vector.broadcast %cst_90 : f32 to vector<16x1xf32>
    %134 = arith.divf %132, %133 : vector<16x1xf32>
    %135 = arith.mulf %129, %129 : vector<16x1xf32>
    %136 = arith.subf %134, %135 : vector<16x1xf32>
    %137 = vector.broadcast %129 : vector<16x1xf32> to vector<16x32xf32>
    %138 = arith.subf %121, %137 : vector<16x32xf32>
    %cst_91 = arith.constant 9.99999996E-13 : f32
    %139 = vector.broadcast %cst_91 : f32 to vector<16x1xf32>
    %140 = arith.addf %136, %139 : vector<16x1xf32>
    %141 = math.rsqrt %140 : vector<16x1xf32>
    %142 = vector.broadcast %141 : vector<16x1xf32> to vector<16x32xf32>
    %143 = arith.mulf %138, %142 : vector<16x32xf32>
    %144 = vector.broadcast %123 : vector<1x32xf32> to vector<16x32xf32>
    %145 = arith.mulf %143, %144 : vector<16x32xf32>
    %146 = vector.broadcast %125 : vector<1x32xf32> to vector<16x32xf32>
    %147 = arith.addf %145, %146 : vector<16x32xf32>
    %c0_92 = arith.constant 0 : index
    %c0_93 = arith.constant 0 : index
    %c0_94 = arith.constant 0 : index
    %148 = vector.load %arg17[%c0_92, %c0_93, %c0_94] : memref<2x32x64xf32, #tpu.memory_space<vmem>>, vector<1x32x64xf32>
    %149 = vector.shape_cast %148 : vector<1x32x64xf32> to vector<32x64xf32>
    %cst_95 = arith.constant dense<0.000000e+00> : vector<16x64xf32>
    %150 = tpu.matmul %147, %149, %cst_95 {dimension_numbers = #tpu.dot_dimension_numbers<[1], [0], [0], [1], [0, 0, 1, 1], [], []>} : vector<16x32xf32>, vector<32x64xf32>, vector<16x64xf32> -> vector<16x64xf32>
    %c0_96 = arith.constant 0 : index
    %c0_97 = arith.constant 0 : index
    %c0_98 = arith.constant 0 : index
    %151 = vector.load %arg18[%c0_96, %c0_97, %c0_98] : memref<2x1x64xf32, #tpu.memory_space<vmem>>, vector<1x1x64xf32>
    %152 = vector.shape_cast %151 : vector<1x1x64xf32> to vector<1x64xf32>
    %153 = vector.broadcast %152 : vector<1x64xf32> to vector<16x64xf32>
    %154 = arith.addf %150, %153 : vector<16x64xf32>
    %cst_99 = arith.constant 5.000000e-01 : f32
    %155 = vector.broadcast %cst_99 : f32 to vector<16x64xf32>
    %156 = arith.mulf %155, %154 : vector<16x64xf32>
    %cst_100 = arith.constant 4.471500e-02 : f32
    %157 = vector.broadcast %cst_100 : f32 to vector<16x64xf32>
    %158 = arith.mulf %157, %154 : vector<16x64xf32>
    %159 = arith.mulf %158, %154 : vector<16x64xf32>
    %160 = arith.mulf %159, %154 : vector<16x64xf32>
    %161 = arith.addf %154, %160 : vector<16x64xf32>
    %cst_101 = arith.constant 0.797884583 : f32
    %162 = vector.broadcast %cst_101 : f32 to vector<16x64xf32>
    %163 = arith.mulf %162, %161 : vector<16x64xf32>
    %164 = math.tanh %163 : vector<16x64xf32>
    %cst_102 = arith.constant 1.000000e+00 : f32
    %165 = vector.broadcast %cst_102 : f32 to vector<16x64xf32>
    %166 = arith.addf %165, %164 : vector<16x64xf32>
    %167 = arith.mulf %156, %166 : vector<16x64xf32>
    %c0_103 = arith.constant 0 : index
    %c0_104 = arith.constant 0 : index
    %c0_105 = arith.constant 0 : index
    %168 = vector.load %arg19[%c0_103, %c0_104, %c0_105] : memref<2x64x32xf32, #tpu.memory_space<vmem>>, vector<1x64x32xf32>
    %169 = vector.shape_cast %168 : vector<1x64x32xf32> to vector<64x32xf32>
    %cst_106 = arith.constant dense<0.000000e+00> : vector<16x32xf32>
    %170 = tpu.matmul %167, %169, %cst_106 {dimension_numbers = #tpu.dot_dimension_numbers<[1], [0], [0], [1], [0, 0, 1, 1], [], []>} : vector<16x64xf32>, vector<64x32xf32>, vector<16x32xf32> -> vector<16x32xf32>
    %c0_107 = arith.constant 0 : index
    %c0_108 = arith.constant 0 : index
    %c0_109 = arith.constant 0 : index
    %171 = vector.load %arg20[%c0_107, %c0_108, %c0_109] : memref<2x1x32xf32, #tpu.memory_space<vmem>>, vector<1x1x32xf32>
    %172 = vector.shape_cast %171 : vector<1x1x32xf32> to vector<1x32xf32>
    %173 = vector.broadcast %172 : vector<1x32xf32> to vector<16x32xf32>
    %174 = arith.addf %170, %173 : vector<16x32xf32>
    %175 = arith.addf %174, %147 : vector<16x32xf32>
    %c0_110 = arith.constant 0 : index
    %c0_111 = arith.constant 0 : index
    %c0_112 = arith.constant 0 : index
    %176 = vector.load %arg21[%c0_110, %c0_111, %c0_112] : memref<2x1x32xf32, #tpu.memory_space<vmem>>, vector<1x1x32xf32>
    %177 = vector.shape_cast %176 : vector<1x1x32xf32> to vector<1x32xf32>
    %c0_113 = arith.constant 0 : index
    %c0_114 = arith.constant 0 : index
    %c0_115 = arith.constant 0 : index
    %178 = vector.load %arg22[%c0_113, %c0_114, %c0_115] : memref<2x1x32xf32, #tpu.memory_space<vmem>>, vector<1x1x32xf32>
    %179 = vector.shape_cast %178 : vector<1x1x32xf32> to vector<1x32xf32>
    %cst_116 = arith.constant dense<0.000000e+00> : vector<16xf32>
    %180 = vector.multi_reduction <add>, %175, %cst_116 [1] : vector<16x32xf32> to vector<16xf32>
    %181 = vector.shape_cast %180 : vector<16xf32> to vector<16x1xf32>
    %cst_117 = arith.constant 3.200000e+01 : f32
    %182 = vector.broadcast %cst_117 : f32 to vector<16x1xf32>
    %183 = arith.divf %181, %182 : vector<16x1xf32>
    %184 = arith.mulf %175, %175 : vector<16x32xf32>
    %cst_118 = arith.constant dense<0.000000e+00> : vector<16xf32>
    %185 = vector.multi_reduction <add>, %184, %cst_118 [1] : vector<16x32xf32> to vector<16xf32>
    %186 = vector.shape_cast %185 : vector<16xf32> to vector<16x1xf32>
    %cst_119 = arith.constant 3.200000e+01 : f32
    %187 = vector.broadcast %cst_119 : f32 to vector<16x1xf32>
    %188 = arith.divf %186, %187 : vector<16x1xf32>
    %189 = arith.mulf %183, %183 : vector<16x1xf32>
    %190 = arith.subf %188, %189 : vector<16x1xf32>
    %191 = vector.broadcast %183 : vector<16x1xf32> to vector<16x32xf32>
    %192 = arith.subf %175, %191 : vector<16x32xf32>
    %cst_120 = arith.constant 9.99999996E-13 : f32
    %193 = vector.broadcast %cst_120 : f32 to vector<16x1xf32>
    %194 = arith.addf %190, %193 : vector<16x1xf32>
    %195 = math.rsqrt %194 : vector<16x1xf32>
    %196 = vector.broadcast %195 : vector<16x1xf32> to vector<16x32xf32>
    %197 = arith.mulf %192, %196 : vector<16x32xf32>
    %198 = vector.broadcast %177 : vector<1x32xf32> to vector<16x32xf32>
    %199 = arith.mulf %197, %198 : vector<16x32xf32>
    %200 = vector.broadcast %179 : vector<1x32xf32> to vector<16x32xf32>
    %201 = arith.addf %199, %200 : vector<16x32xf32>
    %cst_121 = arith.constant 0.000000e+00 : f32
    %202 = vector.broadcast %cst_121 : f32 to vector<16x32xf32>
    %c2 = arith.constant 2 : index
    %c0_122 = arith.constant 0 : index
    %c0_123 = arith.constant 0 : index
    %203 = vector.load %arg7[%c2, %c0_122, %c0_123] : memref<4x32x16xf32, #tpu.memory_space<vmem>>, vector<1x32x16xf32>
    %204 = vector.shape_cast %203 : vector<1x32x16xf32> to vector<32x16xf32>
    %cst_124 = arith.constant dense<0.000000e+00> : vector<16x16xf32>
    %205 = tpu.matmul %201, %204, %cst_124 {dimension_numbers = #tpu.dot_dimension_numbers<[1], [0], [0], [1], [0, 0, 1, 1], [], []>} : vector<16x32xf32>, vector<32x16xf32>, vector<16x16xf32> -> vector<16x16xf32>
    %c2_125 = arith.constant 2 : index
    %c0_126 = arith.constant 0 : index
    %c0_127 = arith.constant 0 : index
    %206 = vector.load %arg10[%c2_125, %c0_126, %c0_127] : memref<4x1x16xf32, #tpu.memory_space<vmem>>, vector<1x1x16xf32>
    %207 = vector.shape_cast %206 : vector<1x1x16xf32> to vector<1x16xf32>
    %208 = vector.broadcast %207 : vector<1x16xf32> to vector<16x16xf32>
    %209 = arith.addf %205, %208 : vector<16x16xf32>
    %c2_128 = arith.constant 2 : index
    %c0_129 = arith.constant 0 : index
    %c0_130 = arith.constant 0 : index
    %210 = vector.load %arg8[%c2_128, %c0_129, %c0_130] : memref<4x32x16xf32, #tpu.memory_space<vmem>>, vector<1x32x16xf32>
    %211 = vector.shape_cast %210 : vector<1x32x16xf32> to vector<32x16xf32>
    %cst_131 = arith.constant dense<0.000000e+00> : vector<16x16xf32>
    %212 = tpu.matmul %201, %211, %cst_131 {dimension_numbers = #tpu.dot_dimension_numbers<[1], [0], [0], [1], [0, 0, 1, 1], [], []>} : vector<16x32xf32>, vector<32x16xf32>, vector<16x16xf32> -> vector<16x16xf32>
    %c2_132 = arith.constant 2 : index
    %c0_133 = arith.constant 0 : index
    %c0_134 = arith.constant 0 : index
    %213 = vector.load %arg11[%c2_132, %c0_133, %c0_134] : memref<4x1x16xf32, #tpu.memory_space<vmem>>, vector<1x1x16xf32>
    %214 = vector.shape_cast %213 : vector<1x1x16xf32> to vector<1x16xf32>
    %215 = vector.broadcast %214 : vector<1x16xf32> to vector<16x16xf32>
    %216 = arith.addf %212, %215 : vector<16x16xf32>
    %c2_135 = arith.constant 2 : index
    %c0_136 = arith.constant 0 : index
    %c0_137 = arith.constant 0 : index
    %217 = vector.load %arg9[%c2_135, %c0_136, %c0_137] : memref<4x32x16xf32, #tpu.memory_space<vmem>>, vector<1x32x16xf32>
    %218 = vector.shape_cast %217 : vector<1x32x16xf32> to vector<32x16xf32>
    %cst_138 = arith.constant dense<0.000000e+00> : vector<16x16xf32>
    %219 = tpu.matmul %201, %218, %cst_138 {dimension_numbers = #tpu.dot_dimension_numbers<[1], [0], [0], [1], [0, 0, 1, 1], [], []>} : vector<16x32xf32>, vector<32x16xf32>, vector<16x16xf32> -> vector<16x16xf32>
    %c2_139 = arith.constant 2 : index
    %c0_140 = arith.constant 0 : index
    %c0_141 = arith.constant 0 : index
    %220 = vector.load %arg12[%c2_139, %c0_140, %c0_141] : memref<4x1x16xf32, #tpu.memory_space<vmem>>, vector<1x1x16xf32>
    %221 = vector.shape_cast %220 : vector<1x1x16xf32> to vector<1x16xf32>
    %222 = vector.broadcast %221 : vector<1x16xf32> to vector<16x16xf32>
    %223 = arith.addf %219, %222 : vector<16x16xf32>
    %cst_142 = arith.constant dense<0.000000e+00> : vector<16x16xf32>
    %224 = tpu.matmul %209, %216, %cst_142 {dimension_numbers = #tpu.dot_dimension_numbers<[1], [1], [0], [0], [0, 0, 1, 0], [], []>} : vector<16x16xf32>, vector<16x16xf32>, vector<16x16xf32> -> vector<16x16xf32>
    %225 = arith.addf %224, %39 : vector<16x16xf32>
    %cst_143 = arith.constant dense<0xFF800000> : vector<16xf32>
    %226 = vector.multi_reduction <maximumf>, %225, %cst_143 [1] : vector<16x16xf32> to vector<16xf32>
    %227 = vector.shape_cast %226 : vector<16xf32> to vector<16x1xf32>
    %228 = vector.broadcast %227 : vector<16x1xf32> to vector<16x16xf32>
    %229 = arith.subf %225, %228 : vector<16x16xf32>
    %230 = math.exp %229 : vector<16x16xf32>
    %cst_144 = arith.constant dense<0.000000e+00> : vector<16xf32>
    %231 = vector.multi_reduction <add>, %230, %cst_144 [1] : vector<16x16xf32> to vector<16xf32>
    %232 = vector.shape_cast %231 : vector<16xf32> to vector<16x1xf32>
    %233 = tpu.reciprocal %232 {approx = true} : vector<16x1xf32> -> vector<16x1xf32>
    %234 = vector.broadcast %233 : vector<16x1xf32> to vector<16x16xf32>
    %235 = arith.mulf %230, %234 : vector<16x16xf32>
    %cst_145 = arith.constant dense<0.000000e+00> : vector<16x16xf32>
    %236 = tpu.matmul %235, %223, %cst_145 {dimension_numbers = #tpu.dot_dimension_numbers<[1], [0], [0], [1], [0, 0, 1, 1], [], []>} : vector<16x16xf32>, vector<16x16xf32>, vector<16x16xf32> -> vector<16x16xf32>
    %c2_146 = arith.constant 2 : index
    %c0_147 = arith.constant 0 : index
    %c0_148 = arith.constant 0 : index
    %237 = vector.load %arg13[%c2_146, %c0_147, %c0_148] : memref<4x16x32xf32, #tpu.memory_space<vmem>>, vector<1x16x32xf32>
    %238 = vector.shape_cast %237 : vector<1x16x32xf32> to vector<16x32xf32>
    %cst_149 = arith.constant dense<0.000000e+00> : vector<16x32xf32>
    %239 = tpu.matmul %236, %238, %cst_149 {dimension_numbers = #tpu.dot_dimension_numbers<[1], [0], [0], [1], [0, 0, 1, 1], [], []>} : vector<16x16xf32>, vector<16x32xf32>, vector<16x32xf32> -> vector<16x32xf32>
    %240 = arith.addf %202, %239 : vector<16x32xf32>
    %c3 = arith.constant 3 : index
    %c0_150 = arith.constant 0 : index
    %c0_151 = arith.constant 0 : index
    %241 = vector.load %arg7[%c3, %c0_150, %c0_151] : memref<4x32x16xf32, #tpu.memory_space<vmem>>, vector<1x32x16xf32>
    %242 = vector.shape_cast %241 : vector<1x32x16xf32> to vector<32x16xf32>
    %cst_152 = arith.constant dense<0.000000e+00> : vector<16x16xf32>
    %243 = tpu.matmul %201, %242, %cst_152 {dimension_numbers = #tpu.dot_dimension_numbers<[1], [0], [0], [1], [0, 0, 1, 1], [], []>} : vector<16x32xf32>, vector<32x16xf32>, vector<16x16xf32> -> vector<16x16xf32>
    %c3_153 = arith.constant 3 : index
    %c0_154 = arith.constant 0 : index
    %c0_155 = arith.constant 0 : index
    %244 = vector.load %arg10[%c3_153, %c0_154, %c0_155] : memref<4x1x16xf32, #tpu.memory_space<vmem>>, vector<1x1x16xf32>
    %245 = vector.shape_cast %244 : vector<1x1x16xf32> to vector<1x16xf32>
    %246 = vector.broadcast %245 : vector<1x16xf32> to vector<16x16xf32>
    %247 = arith.addf %243, %246 : vector<16x16xf32>
    %c3_156 = arith.constant 3 : index
    %c0_157 = arith.constant 0 : index
    %c0_158 = arith.constant 0 : index
    %248 = vector.load %arg8[%c3_156, %c0_157, %c0_158] : memref<4x32x16xf32, #tpu.memory_space<vmem>>, vector<1x32x16xf32>
    %249 = vector.shape_cast %248 : vector<1x32x16xf32> to vector<32x16xf32>
    %cst_159 = arith.constant dense<0.000000e+00> : vector<16x16xf32>
    %250 = tpu.matmul %201, %249, %cst_159 {dimension_numbers = #tpu.dot_dimension_numbers<[1], [0], [0], [1], [0, 0, 1, 1], [], []>} : vector<16x32xf32>, vector<32x16xf32>, vector<16x16xf32> -> vector<16x16xf32>
    %c3_160 = arith.constant 3 : index
    %c0_161 = arith.constant 0 : index
    %c0_162 = arith.constant 0 : index
    %251 = vector.load %arg11[%c3_160, %c0_161, %c0_162] : memref<4x1x16xf32, #tpu.memory_space<vmem>>, vector<1x1x16xf32>
    %252 = vector.shape_cast %251 : vector<1x1x16xf32> to vector<1x16xf32>
    %253 = vector.broadcast %252 : vector<1x16xf32> to vector<16x16xf32>
    %254 = arith.addf %250, %253 : vector<16x16xf32>
    %c3_163 = arith.constant 3 : index
    %c0_164 = arith.constant 0 : index
    %c0_165 = arith.constant 0 : index
    %255 = vector.load %arg9[%c3_163, %c0_164, %c0_165] : memref<4x32x16xf32, #tpu.memory_space<vmem>>, vector<1x32x16xf32>
    %256 = vector.shape_cast %255 : vector<1x32x16xf32> to vector<32x16xf32>
    %cst_166 = arith.constant dense<0.000000e+00> : vector<16x16xf32>
    %257 = tpu.matmul %201, %256, %cst_166 {dimension_numbers = #tpu.dot_dimension_numbers<[1], [0], [0], [1], [0, 0, 1, 1], [], []>} : vector<16x32xf32>, vector<32x16xf32>, vector<16x16xf32> -> vector<16x16xf32>
    %c3_167 = arith.constant 3 : index
    %c0_168 = arith.constant 0 : index
    %c0_169 = arith.constant 0 : index
    %258 = vector.load %arg12[%c3_167, %c0_168, %c0_169] : memref<4x1x16xf32, #tpu.memory_space<vmem>>, vector<1x1x16xf32>
    %259 = vector.shape_cast %258 : vector<1x1x16xf32> to vector<1x16xf32>
    %260 = vector.broadcast %259 : vector<1x16xf32> to vector<16x16xf32>
    %261 = arith.addf %257, %260 : vector<16x16xf32>
    %cst_170 = arith.constant dense<0.000000e+00> : vector<16x16xf32>
    %262 = tpu.matmul %247, %254, %cst_170 {dimension_numbers = #tpu.dot_dimension_numbers<[1], [1], [0], [0], [0, 0, 1, 0], [], []>} : vector<16x16xf32>, vector<16x16xf32>, vector<16x16xf32> -> vector<16x16xf32>
    %263 = arith.addf %262, %39 : vector<16x16xf32>
    %cst_171 = arith.constant dense<0xFF800000> : vector<16xf32>
    %264 = vector.multi_reduction <maximumf>, %263, %cst_171 [1] : vector<16x16xf32> to vector<16xf32>
    %265 = vector.shape_cast %264 : vector<16xf32> to vector<16x1xf32>
    %266 = vector.broadcast %265 : vector<16x1xf32> to vector<16x16xf32>
    %267 = arith.subf %263, %266 : vector<16x16xf32>
    %268 = math.exp %267 : vector<16x16xf32>
    %cst_172 = arith.constant dense<0.000000e+00> : vector<16xf32>
    %269 = vector.multi_reduction <add>, %268, %cst_172 [1] : vector<16x16xf32> to vector<16xf32>
    %270 = vector.shape_cast %269 : vector<16xf32> to vector<16x1xf32>
    %271 = tpu.reciprocal %270 {approx = true} : vector<16x1xf32> -> vector<16x1xf32>
    %272 = vector.broadcast %271 : vector<16x1xf32> to vector<16x16xf32>
    %273 = arith.mulf %268, %272 : vector<16x16xf32>
    %cst_173 = arith.constant dense<0.000000e+00> : vector<16x16xf32>
    %274 = tpu.matmul %273, %261, %cst_173 {dimension_numbers = #tpu.dot_dimension_numbers<[1], [0], [0], [1], [0, 0, 1, 1], [], []>} : vector<16x16xf32>, vector<16x16xf32>, vector<16x16xf32> -> vector<16x16xf32>
    %c3_174 = arith.constant 3 : index
    %c0_175 = arith.constant 0 : index
    %c0_176 = arith.constant 0 : index
    %275 = vector.load %arg13[%c3_174, %c0_175, %c0_176] : memref<4x16x32xf32, #tpu.memory_space<vmem>>, vector<1x16x32xf32>
    %276 = vector.shape_cast %275 : vector<1x16x32xf32> to vector<16x32xf32>
    %cst_177 = arith.constant dense<0.000000e+00> : vector<16x32xf32>
    %277 = tpu.matmul %274, %276, %cst_177 {dimension_numbers = #tpu.dot_dimension_numbers<[1], [0], [0], [1], [0, 0, 1, 1], [], []>} : vector<16x16xf32>, vector<16x32xf32>, vector<16x32xf32> -> vector<16x32xf32>
    %278 = arith.addf %240, %277 : vector<16x32xf32>
    %c1_178 = arith.constant 1 : index
    %c0_179 = arith.constant 0 : index
    %c0_180 = arith.constant 0 : index
    %279 = vector.load %arg14[%c1_178, %c0_179, %c0_180] : memref<2x1x32xf32, #tpu.memory_space<vmem>>, vector<1x1x32xf32>
    %280 = vector.shape_cast %279 : vector<1x1x32xf32> to vector<1x32xf32>
    %281 = vector.broadcast %280 : vector<1x32xf32> to vector<16x32xf32>
    %282 = arith.addf %278, %281 : vector<16x32xf32>
    %283 = arith.addf %282, %201 : vector<16x32xf32>
    %c1_181 = arith.constant 1 : index
    %c0_182 = arith.constant 0 : index
    %c0_183 = arith.constant 0 : index
    %284 = vector.load %arg15[%c1_181, %c0_182, %c0_183] : memref<2x1x32xf32, #tpu.memory_space<vmem>>, vector<1x1x32xf32>
    %285 = vector.shape_cast %284 : vector<1x1x32xf32> to vector<1x32xf32>
    %c1_184 = arith.constant 1 : index
    %c0_185 = arith.constant 0 : index
    %c0_186 = arith.constant 0 : index
    %286 = vector.load %arg16[%c1_184, %c0_185, %c0_186] : memref<2x1x32xf32, #tpu.memory_space<vmem>>, vector<1x1x32xf32>
    %287 = vector.shape_cast %286 : vector<1x1x32xf32> to vector<1x32xf32>
    %cst_187 = arith.constant dense<0.000000e+00> : vector<16xf32>
    %288 = vector.multi_reduction <add>, %283, %cst_187 [1] : vector<16x32xf32> to vector<16xf32>
    %289 = vector.shape_cast %288 : vector<16xf32> to vector<16x1xf32>
    %cst_188 = arith.constant 3.200000e+01 : f32
    %290 = vector.broadcast %cst_188 : f32 to vector<16x1xf32>
    %291 = arith.divf %289, %290 : vector<16x1xf32>
    %292 = arith.mulf %283, %283 : vector<16x32xf32>
    %cst_189 = arith.constant dense<0.000000e+00> : vector<16xf32>
    %293 = vector.multi_reduction <add>, %292, %cst_189 [1] : vector<16x32xf32> to vector<16xf32>
    %294 = vector.shape_cast %293 : vector<16xf32> to vector<16x1xf32>
    %cst_190 = arith.constant 3.200000e+01 : f32
    %295 = vector.broadcast %cst_190 : f32 to vector<16x1xf32>
    %296 = arith.divf %294, %295 : vector<16x1xf32>
    %297 = arith.mulf %291, %291 : vector<16x1xf32>
    %298 = arith.subf %296, %297 : vector<16x1xf32>
    %299 = vector.broadcast %291 : vector<16x1xf32> to vector<16x32xf32>
    %300 = arith.subf %283, %299 : vector<16x32xf32>
    %cst_191 = arith.constant 9.99999996E-13 : f32
    %301 = vector.broadcast %cst_191 : f32 to vector<16x1xf32>
    %302 = arith.addf %298, %301 : vector<16x1xf32>
    %303 = math.rsqrt %302 : vector<16x1xf32>
    %304 = vector.broadcast %303 : vector<16x1xf32> to vector<16x32xf32>
    %305 = arith.mulf %300, %304 : vector<16x32xf32>
    %306 = vector.broadcast %285 : vector<1x32xf32> to vector<16x32xf32>
    %307 = arith.mulf %305, %306 : vector<16x32xf32>
    %308 = vector.broadcast %287 : vector<1x32xf32> to vector<16x32xf32>
    %309 = arith.addf %307, %308 : vector<16x32xf32>
    %c1_192 = arith.constant 1 : index
    %c0_193 = arith.constant 0 : index
    %c0_194 = arith.constant 0 : index
    %310 = vector.load %arg17[%c1_192, %c0_193, %c0_194] : memref<2x32x64xf32, #tpu.memory_space<vmem>>, vector<1x32x64xf32>
    %311 = vector.shape_cast %310 : vector<1x32x64xf32> to vector<32x64xf32>
    %cst_195 = arith.constant dense<0.000000e+00> : vector<16x64xf32>
    %312 = tpu.matmul %309, %311, %cst_195 {dimension_numbers = #tpu.dot_dimension_numbers<[1], [0], [0], [1], [0, 0, 1, 1], [], []>} : vector<16x32xf32>, vector<32x64xf32>, vector<16x64xf32> -> vector<16x64xf32>
    %c1_196 = arith.constant 1 : index
    %c0_197 = arith.constant 0 : index
    %c0_198 = arith.constant 0 : index
    %313 = vector.load %arg18[%c1_196, %c0_197, %c0_198] : memref<2x1x64xf32, #tpu.memory_space<vmem>>, vector<1x1x64xf32>
    %314 = vector.shape_cast %313 : vector<1x1x64xf32> to vector<1x64xf32>
    %315 = vector.broadcast %314 : vector<1x64xf32> to vector<16x64xf32>
    %316 = arith.addf %312, %315 : vector<16x64xf32>
    %cst_199 = arith.constant 5.000000e-01 : f32
    %317 = vector.broadcast %cst_199 : f32 to vector<16x64xf32>
    %318 = arith.mulf %317, %316 : vector<16x64xf32>
    %cst_200 = arith.constant 4.471500e-02 : f32
    %319 = vector.broadcast %cst_200 : f32 to vector<16x64xf32>
    %320 = arith.mulf %319, %316 : vector<16x64xf32>
    %321 = arith.mulf %320, %316 : vector<16x64xf32>
    %322 = arith.mulf %321, %316 : vector<16x64xf32>
    %323 = arith.addf %316, %322 : vector<16x64xf32>
    %cst_201 = arith.constant 0.797884583 : f32
    %324 = vector.broadcast %cst_201 : f32 to vector<16x64xf32>
    %325 = arith.mulf %324, %323 : vector<16x64xf32>
    %326 = math.tanh %325 : vector<16x64xf32>
    %cst_202 = arith.constant 1.000000e+00 : f32
    %327 = vector.broadcast %cst_202 : f32 to vector<16x64xf32>
    %328 = arith.addf %327, %326 : vector<16x64xf32>
    %329 = arith.mulf %318, %328 : vector<16x64xf32>
    %c1_203 = arith.constant 1 : index
    %c0_204 = arith.constant 0 : index
    %c0_205 = arith.constant 0 : index
    %330 = vector.load %arg19[%c1_203, %c0_204, %c0_205] : memref<2x64x32xf32, #tpu.memory_space<vmem>>, vector<1x64x32xf32>
    %331 = vector.shape_cast %330 : vector<1x64x32xf32> to vector<64x32xf32>
    %cst_206 = arith.constant dense<0.000000e+00> : vector<16x32xf32>
    %332 = tpu.matmul %329, %331, %cst_206 {dimension_numbers = #tpu.dot_dimension_numbers<[1], [0], [0], [1], [0, 0, 1, 1], [], []>} : vector<16x64xf32>, vector<64x32xf32>, vector<16x32xf32> -> vector<16x32xf32>
    %c1_207 = arith.constant 1 : index
    %c0_208 = arith.constant 0 : index
    %c0_209 = arith.constant 0 : index
    %333 = vector.load %arg20[%c1_207, %c0_208, %c0_209] : memref<2x1x32xf32, #tpu.memory_space<vmem>>, vector<1x1x32xf32>
    %334 = vector.shape_cast %333 : vector<1x1x32xf32> to vector<1x32xf32>
    %335 = vector.broadcast %334 : vector<1x32xf32> to vector<16x32xf32>
    %336 = arith.addf %332, %335 : vector<16x32xf32>
    %337 = arith.addf %336, %309 : vector<16x32xf32>
    %c1_210 = arith.constant 1 : index
    %c0_211 = arith.constant 0 : index
    %c0_212 = arith.constant 0 : index
    %338 = vector.load %arg21[%c1_210, %c0_211, %c0_212] : memref<2x1x32xf32, #tpu.memory_space<vmem>>, vector<1x1x32xf32>
    %339 = vector.shape_cast %338 : vector<1x1x32xf32> to vector<1x32xf32>
    %c1_213 = arith.constant 1 : index
    %c0_214 = arith.constant 0 : index
    %c0_215 = arith.constant 0 : index
    %340 = vector.load %arg22[%c1_213, %c0_214, %c0_215] : memref<2x1x32xf32, #tpu.memory_space<vmem>>, vector<1x1x32xf32>
    %341 = vector.shape_cast %340 : vector<1x1x32xf32> to vector<1x32xf32>
    %cst_216 = arith.constant dense<0.000000e+00> : vector<16xf32>
    %342 = vector.multi_reduction <add>, %337, %cst_216 [1] : vector<16x32xf32> to vector<16xf32>
    %343 = vector.shape_cast %342 : vector<16xf32> to vector<16x1xf32>
    %cst_217 = arith.constant 3.200000e+01 : f32
    %344 = vector.broadcast %cst_217 : f32 to vector<16x1xf32>
    %345 = arith.divf %343, %344 : vector<16x1xf32>
    %346 = arith.mulf %337, %337 : vector<16x32xf32>
    %cst_218 = arith.constant dense<0.000000e+00> : vector<16xf32>
    %347 = vector.multi_reduction <add>, %346, %cst_218 [1] : vector<16x32xf32> to vector<16xf32>
    %348 = vector.shape_cast %347 : vector<16xf32> to vector<16x1xf32>
    %cst_219 = arith.constant 3.200000e+01 : f32
    %349 = vector.broadcast %cst_219 : f32 to vector<16x1xf32>
    %350 = arith.divf %348, %349 : vector<16x1xf32>
    %351 = arith.mulf %345, %345 : vector<16x1xf32>
    %352 = arith.subf %350, %351 : vector<16x1xf32>
    %353 = vector.broadcast %345 : vector<16x1xf32> to vector<16x32xf32>
    %354 = arith.subf %337, %353 : vector<16x32xf32>
    %cst_220 = arith.constant 9.99999996E-13 : f32
    %355 = vector.broadcast %cst_220 : f32 to vector<16x1xf32>
    %356 = arith.addf %352, %355 : vector<16x1xf32>
    %357 = math.rsqrt %356 : vector<16x1xf32>
    %358 = vector.broadcast %357 : vector<16x1xf32> to vector<16x32xf32>
    %359 = arith.mulf %354, %358 : vector<16x32xf32>
    %360 = vector.broadcast %339 : vector<1x32xf32> to vector<16x32xf32>
    %361 = arith.mulf %359, %360 : vector<16x32xf32>
    %362 = vector.broadcast %341 : vector<1x32xf32> to vector<16x32xf32>
    %363 = arith.addf %361, %362 : vector<16x32xf32>
    %c0_221 = arith.constant 0 : index
    %c0_222 = arith.constant 0 : index
    %364 = vector.load %arg23[%c0_221, %c0_222] : memref<8x16xf32, #tpu.memory_space<vmem>>, vector<8x16xf32>
    %cst_223 = arith.constant dense<0.000000e+00> : vector<8x32xf32>
    %365 = tpu.matmul %364, %363, %cst_223 {dimension_numbers = #tpu.dot_dimension_numbers<[1], [0], [0], [1], [0, 0, 1, 1], [], []>} : vector<8x16xf32>, vector<16x32xf32>, vector<8x32xf32> -> vector<8x32xf32>
    %c0_224 = arith.constant 0 : index
    %c0_225 = arith.constant 0 : index
    %366 = vector.load %arg24[%c0_224, %c0_225] : memref<32x32xf32, #tpu.memory_space<vmem>>, vector<32x32xf32>
    %cst_226 = arith.constant dense<0.000000e+00> : vector<8x32xf32>
    %367 = tpu.matmul %365, %366, %cst_226 {dimension_numbers = #tpu.dot_dimension_numbers<[1], [0], [0], [1], [0, 0, 1, 1], [], []>} : vector<8x32xf32>, vector<32x32xf32>, vector<8x32xf32> -> vector<8x32xf32>
    %c0_227 = arith.constant 0 : index
    %c0_228 = arith.constant 0 : index
    %368 = vector.load %arg25[%c0_227, %c0_228] : memref<1x32xf32, #tpu.memory_space<vmem>>, vector<1x32xf32>
    %369 = vector.broadcast %368 : vector<1x32xf32> to vector<8x32xf32>
    %370 = arith.addf %367, %369 : vector<8x32xf32>
    %371 = math.tanh %370 : vector<8x32xf32>
    %c0_229 = arith.constant 0 : index
    %c0_230 = arith.constant 0 : index
    %372 = vector.load %arg26[%c0_229, %c0_230] : memref<32x128xf32, #tpu.memory_space<vmem>>, vector<32x128xf32>
    %cst_231 = arith.constant dense<0.000000e+00> : vector<8x128xf32>
    %373 = tpu.matmul %371, %372, %cst_231 {dimension_numbers = #tpu.dot_dimension_numbers<[1], [0], [0], [1], [0, 0, 1, 1], [], []>} : vector<8x32xf32>, vector<32x128xf32>, vector<8x128xf32> -> vector<8x128xf32>
    %c0_232 = arith.constant 0 : index
    %c0_233 = arith.constant 0 : index
    %374 = vector.load %arg27[%c0_232, %c0_233] : memref<1x128xf32, #tpu.memory_space<vmem>>, vector<1x128xf32>
    %375 = vector.broadcast %374 : vector<1x128xf32> to vector<8x128xf32>
    %376 = arith.addf %373, %375 : vector<8x128xf32>
    %c0_234 = arith.constant 0 : index
    %c0_235 = arith.constant 0 : index
    %377 = vector.load %arg28[%c0_234, %c0_235] : memref<8x128xf32, #tpu.memory_space<vmem>>, vector<8x128xf32>
    tpu.vector_store %arg28[%c0_234, %c0_235], %376 {strides = array<i32>} : memref<8x128xf32, #tpu.memory_space<vmem>>, vector<8x128xf32>,
    return
  }
}

</mosaic_0001>

<llo_original>
// kernel: transformer_lstm_forward.1
$region0: #{transformer_lstm_forward.1}
  #allocation0 [shape = 'u32[]', space=smem, size = 0x4, offset = 0x4, fixed_abs, tag = 'smem constant byte address 0x4 - core index']
  #allocation1 [shape = 'u32[72,128]{1,0:T(1,128)}', space=vmem, size = 0x9000, scoped, tag = 'internal scratch']
  %s0 = inlined_call_operand.vmem [shape: s32[16,1], index: 0, kind: input, shape index: {}]
  %s1 = inlined_call_operand.vmem [shape: f32[128,32], index: 1, kind: input, shape index: {}]
  %s2 = inlined_call_operand.vmem [shape: f32[16,32], index: 2, kind: input, shape index: {}]
  %s3 = inlined_call_operand.vmem [shape: f32[2,32], index: 3, kind: input, shape index: {}]
  %s4 = inlined_call_operand.vmem [shape: f32[1,32], index: 4, kind: input, shape index: {}]
  %s5 = inlined_call_operand.vmem [shape: f32[1,32], index: 5, kind: input, shape index: {}]
  %s6 = inlined_call_operand.vmem [shape: f32[16,16], index: 6, kind: input, shape index: {}]
  %s7 = inlined_call_operand.vmem [shape: f32[4,32,16], index: 7, kind: input, shape index: {}]
  %s8 = inlined_call_operand.vmem [shape: f32[4,32,16], index: 8, kind: input, shape index: {}]
  %s9 = inlined_call_operand.vmem [shape: f32[4,32,16], index: 9, kind: input, shape index: {}]
  %s10 = inlined_call_operand.vmem [shape: f32[4,1,16], index: 10, kind: input, shape index: {}]
  %s11 = inlined_call_operand.vmem [shape: f32[4,1,16], index: 11, kind: input, shape index: {}]
  %s12 = inlined_call_operand.vmem [shape: f32[4,1,16], index: 12, kind: input, shape index: {}]
  %s13 = inlined_call_operand.vmem [shape: f32[4,16,32], index: 13, kind: input, shape index: {}]
  %s14 = inlined_call_operand.vmem [shape: f32[2,1,32], index: 14, kind: input, shape index: {}]
  %s15 = inlined_call_operand.vmem [shape: f32[2,1,32], index: 15, kind: input, shape index: {}]
  %s16 = inlined_call_operand.vmem [shape: f32[2,1,32], index: 16, kind: input, shape index: {}]
  %s17 = inlined_call_operand.vmem [shape: f32[2,32,64], index: 17, kind: input, shape index: {}]
  %s18 = inlined_call_operand.vmem [shape: f32[2,1,64], index: 18, kind: input, shape index: {}]
  %s19 = inlined_call_operand.vmem [shape: f32[2,64,32], index: 19, kind: input, shape index: {}]
  %s20 = inlined_call_operand.vmem [shape: f32[2,1,32], index: 20, kind: input, shape index: {}]
  %s21 = inlined_call_operand.vmem [shape: f32[2,1,32], index: 21, kind: input, shape index: {}]
  %s22 = inlined_call_operand.vmem [shape: f32[2,1,32], index: 22, kind: input, shape index: {}]
  %s23 = inlined_call_operand.vmem [shape: f32[8,16], index: 23, kind: input, shape index: {}]
  %s24 = inlined_call_operand.vmem [shape: f32[32,32], index: 24, kind: input, shape index: {}]
  %s25 = inlined_call_operand.vmem [shape: f32[1,32], index: 25, kind: input, shape index: {}]
  %s26 = inlined_call_operand.vmem [shape: f32[32,128], index: 26, kind: input, shape index: {}]
  %s27 = inlined_call_operand.vmem [shape: f32[1,128], index: 27, kind: input, shape index: {}]
  %s28 = inlined_call_operand.vmem [shape: f32[8,128], index: 28, kind: output, shape index: {}]
  %s29 = sld [smem:[#allocation0]]
  $region122: #{transformer_lstm_forward.1} parent=0
    _
  %s31 = ssub.s32 1, %s29
  %s32 = scalar_select 0, %s31, %s29
  // Predicated region
  $region2: #{transformer_lstm_forward.1} parent=0 // pred_check
    _
  $region3: #{transformer_lstm_forward.1} parent=0 // pred_check_branch
    %34 = sbr.rel (0) target = $region5
  $region4: #{transformer_lstm_forward.1} parent=0 // pred_region
    _
  $region5: #{transformer_lstm_forward.1} parent=0 // pred_fallthru
    _
  // Predicated region
  $region6: #{transformer_lstm_forward.1} parent=0 // pred_check
    _
  $region7: #{transformer_lstm_forward.1} parent=0 // pred_check_branch
    %36 = sbr.rel (0) target = $region9
  $region8: #{transformer_lstm_forward.1} parent=0 // pred_region
    _
  $region9: #{transformer_lstm_forward.1} parent=0 // pred_fallthru
    _
  // Predicated region
  $region10: #{transformer_lstm_forward.1} parent=0 // pred_check
    _
  $region11: #{transformer_lstm_forward.1} parent=0 // pred_check_branch
    %38 = sbr.rel (0) target = $region13
  $region12: #{transformer_lstm_forward.1} parent=0 // pred_region
    _
  $region13: #{transformer_lstm_forward.1} parent=0 // pred_fallthru
    _
  // Predicated region
  $region14: #{transformer_lstm_forward.1} parent=0 // pred_check
    _
  $region15: #{transformer_lstm_forward.1} parent=0 // pred_check_branch
    %40 = sbr.rel (0) target = $region17
  $region16: #{transformer_lstm_forward.1} parent=0 // pred_region
    _
  $region17: #{transformer_lstm_forward.1} parent=0 // pred_fallthru
    _
  // Predicated region
  $region18: #{transformer_lstm_forward.1} parent=0 // pred_check
    _
  $region19: #{transformer_lstm_forward.1} parent=0 // pred_check_branch
    %42 = sbr.rel (0) target = $region21
  $region20: #{transformer_lstm_forward.1} parent=0 // pred_region
    _
  $region21: #{transformer_lstm_forward.1} parent=0 // pred_fallthru
    _
  // Predicated region
  $region22: #{transformer_lstm_forward.1} parent=0 // pred_check
    _
  $region23: #{transformer_lstm_forward.1} parent=0 // pred_check_branch
    %44 = sbr.rel (0) target = $region25
  $region24: #{transformer_lstm_forward.1} parent=0 // pred_region
    _
  $region25: #{transformer_lstm_forward.1} parent=0 // pred_fallthru
    _
  // Predicated region
  $region26: #{transformer_lstm_forward.1} parent=0 // pred_check
    _
  $region27: #{transformer_lstm_forward.1} parent=0 // pred_check_branch
    %46 = sbr.rel (0) target = $region29
  $region28: #{transformer_lstm_forward.1} parent=0 // pred_region
    _
  $region29: #{transformer_lstm_forward.1} parent=0 // pred_fallthru
    _
  // Predicated region
  $region30: #{transformer_lstm_forward.1} parent=0 // pred_check
    _
  $region31: #{transformer_lstm_forward.1} parent=0 // pred_check_branch
    %48 = sbr.rel (0) target = $region33
  $region32: #{transformer_lstm_forward.1} parent=0 // pred_region
    _
  $region33: #{transformer_lstm_forward.1} parent=0 // pred_fallthru
    _
  // Predicated region
  $region34: #{transformer_lstm_forward.1} parent=0 // pred_check
    _
  $region35: #{transformer_lstm_forward.1} parent=0 // pred_check_branch
    %50 = sbr.rel (0) target = $region37
  $region36: #{transformer_lstm_forward.1} parent=0 // pred_region
    _
  $region37: #{transformer_lstm_forward.1} parent=0 // pred_fallthru
    _
  // Predicated region
  $region38: #{transformer_lstm_forward.1} parent=0 // pred_check
    _
  $region39: #{transformer_lstm_forward.1} parent=0 // pred_check_branch
    %52 = sbr.rel (0) target = $region41
  $region40: #{transformer_lstm_forward.1} parent=0 // pred_region
    _
  $region41: #{transformer_lstm_forward.1} parent=0 // pred_fallthru
    _
  // Predicated region
  $region42: #{transformer_lstm_forward.1} parent=0 // pred_check
    _
  $region43: #{transformer_lstm_forward.1} parent=0 // pred_check_branch
    %54 = sbr.rel (0) target = $region45
  $region44: #{transformer_lstm_forward.1} parent=0 // pred_region
    _
  $region45: #{transformer_lstm_forward.1} parent=0 // pred_fallthru
    _
  // Predicated region
  $region46: #{transformer_lstm_forward.1} parent=0 // pred_check
    _
  $region47: #{transformer_lstm_forward.1} parent=0 // pred_check_branch
    %56 = sbr.rel (0) target = $region49
  $region48: #{transformer_lstm_forward.1} parent=0 // pred_region
    _
  $region49: #{transformer_lstm_forward.1} parent=0 // pred_fallthru
    _
  // Predicated region
  $region50: #{transformer_lstm_forward.1} parent=0 // pred_check
    _
  $region51: #{transformer_lstm_forward.1} parent=0 // pred_check_branch
    %58 = sbr.rel (0) target = $region53
  $region52: #{transformer_lstm_forward.1} parent=0 // pred_region
    _
  $region53: #{transformer_lstm_forward.1} parent=0 // pred_fallthru
    _
  // Predicated region
  $region54: #{transformer_lstm_forward.1} parent=0 // pred_check
    _
  $region55: #{transformer_lstm_forward.1} parent=0 // pred_check_branch
    %60 = sbr.rel (0) target = $region57
  $region56: #{transformer_lstm_forward.1} parent=0 // pred_region
    _
  $region57: #{transformer_lstm_forward.1} parent=0 // pred_fallthru
    _
  // Predicated region
  $region58: #{transformer_lstm_forward.1} parent=0 // pred_check
    _
  $region59: #{transformer_lstm_forward.1} parent=0 // pred_check_branch
    %62 = sbr.rel (0) target = $region61
  $region60: #{transformer_lstm_forward.1} parent=0 // pred_region
    _
  $region61: #{transformer_lstm_forward.1} parent=0 // pred_fallthru
    _
  // Predicated region
  $region62: #{transformer_lstm_forward.1} parent=0 // pred_check
    _
  $region63: #{transformer_lstm_forward.1} parent=0 // pred_check_branch
    %64 = sbr.rel (0) target = $region65
  $region64: #{transformer_lstm_forward.1} parent=0 // pred_region
    _
  $region65: #{transformer_lstm_forward.1} parent=0 // pred_fallthru
    _
  // Predicated region
  $region66: #{transformer_lstm_forward.1} parent=0 // pred_check
    _
  $region67: #{transformer_lstm_forward.1} parent=0 // pred_check_branch
    %66 = sbr.rel (0) target = $region69
  $region68: #{transformer_lstm_forward.1} parent=0 // pred_region
    _
  $region69: #{transformer_lstm_forward.1} parent=0 // pred_fallthru
    _
  // Predicated region
  $region70: #{transformer_lstm_forward.1} parent=0 // pred_check
    _
  $region71: #{transformer_lstm_forward.1} parent=0 // pred_check_branch
    %68 = sbr.rel (0) target = $region73
  $region72: #{transformer_lstm_forward.1} parent=0 // pred_region
    _
  $region73: #{transformer_lstm_forward.1} parent=0 // pred_fallthru
    _
  // Predicated region
  $region74: #{transformer_lstm_forward.1} parent=0 // pred_check
    _
  $region75: #{transformer_lstm_forward.1} parent=0 // pred_check_branch
    %70 = sbr.rel (0) target = $region77
  $region76: #{transformer_lstm_forward.1} parent=0 // pred_region
    _
  $region77: #{transformer_lstm_forward.1} parent=0 // pred_fallthru
    _
  // Predicated region
  $region78: #{transformer_lstm_forward.1} parent=0 // pred_check
    _
  $region79: #{transformer_lstm_forward.1} parent=0 // pred_check_branch
    %72 = sbr.rel (0) target = $region81
  $region80: #{transformer_lstm_forward.1} parent=0 // pred_region
    _
  $region81: #{transformer_lstm_forward.1} parent=0 // pred_fallthru
    _
  // Predicated region
  $region82: #{transformer_lstm_forward.1} parent=0 // pred_check
    _
  $region83: #{transformer_lstm_forward.1} parent=0 // pred_check_branch
    %74 = sbr.rel (0) target = $region85
  $region84: #{transformer_lstm_forward.1} parent=0 // pred_region
    _
  $region85: #{transformer_lstm_forward.1} parent=0 // pred_fallthru
    _
  // Predicated region
  $region86: #{transformer_lstm_forward.1} parent=0 // pred_check
    _
  $region87: #{transformer_lstm_forward.1} parent=0 // pred_check_branch
    %76 = sbr.rel (0) target = $region89
  $region88: #{transformer_lstm_forward.1} parent=0 // pred_region
    _
  $region89: #{transformer_lstm_forward.1} parent=0 // pred_fallthru
    _
  // Predicated region
  $region90: #{transformer_lstm_forward.1} parent=0 // pred_check
    _
  $region91: #{transformer_lstm_forward.1} parent=0 // pred_check_branch
    %78 = sbr.rel (0) target = $region93
  $region92: #{transformer_lstm_forward.1} parent=0 // pred_region
    _
  $region93: #{transformer_lstm_forward.1} parent=0 // pred_fallthru
    _
  // Predicated region
  $region94: #{transformer_lstm_forward.1} parent=0 // pred_check
    _
  $region95: #{transformer_lstm_forward.1} parent=0 // pred_check_branch
    %80 = sbr.rel (0) target = $region97
  $region96: #{transformer_lstm_forward.1} parent=0 // pred_region
    _
  $region97: #{transformer_lstm_forward.1} parent=0 // pred_fallthru
    _
  // Predicated region
  $region98: #{transformer_lstm_forward.1} parent=0 // pred_check
    _
  $region99: #{transformer_lstm_forward.1} parent=0 // pred_check_branch
    %82 = sbr.rel (0) target = $region101
  $region100: #{transformer_lstm_forward.1} parent=0 // pred_region
    _
  $region101: #{transformer_lstm_forward.1} parent=0 // pred_fallthru
    _
  // Predicated region
  $region102: #{transformer_lstm_forward.1} parent=0 // pred_check
    _
  $region103: #{transformer_lstm_forward.1} parent=0 // pred_check_branch
    %84 = sbr.rel (0) target = $region105
  $region104: #{transformer_lstm_forward.1} parent=0 // pred_region
    _
  $region105: #{transformer_lstm_forward.1} parent=0 // pred_fallthru
    _
  // Predicated region
  $region106: #{transformer_lstm_forward.1} parent=0 // pred_check
    _
  $region107: #{transformer_lstm_forward.1} parent=0 // pred_check_branch
    %86 = sbr.rel (0) target = $region109
  $region108: #{transformer_lstm_forward.1} parent=0 // pred_region
    _
  $region109: #{transformer_lstm_forward.1} parent=0 // pred_fallthru
    _
  // Predicated region
  $region110: #{transformer_lstm_forward.1} parent=0 // pred_check
    _
  $region111: #{transformer_lstm_forward.1} parent=0 // pred_check_branch
    %88 = sbr.rel (0) target = $region113
  $region112: #{transformer_lstm_forward.1} parent=0 // pred_region
    _
  $region113: #{transformer_lstm_forward.1} parent=0 // pred_fallthru
    _
  %v89 = vlaneseq
  %v90 = vand.u32 %v89, 127
  %v91 = vld [vmem:[%s0] sm:$0xff]
  %v92 = vld [vmem:[%s0 + $0x8] sm:$0xff]
  %93 = vset.pattern.permute.xlu0 0
  %94 = vperm.xlu0 %93, %v91
  %v95 = vpop.permute.xlu0 %94
  %96 = vset.pattern.permute.xlu0 0
  %97 = vperm.xlu0 %96, %v92
  %v98 = vpop.permute.xlu0 %97
  %vm99 = vcmp.eq.s32.totalorder %v90, %v95
  %vm100 = vcmp.eq.s32.totalorder %v90, %v98
  %v101 = vsel %vm99, 1.0, 0.0
  %v102 = vsel %vm100, 1.0, 0.0
  %v103 = vld [vmem:[%s1] sm:$0xff]
  %v104 = vld [vmem:[%s1 + $0x8] sm:$0xff]
  %v105 = vld [vmem:[%s1 + $0x10] sm:$0xff]
  %v106 = vld [vmem:[%s1 + $0x18] sm:$0xff]
  %v107 = vld [vmem:[%s1 + $0x20] sm:$0xff]
  %v108 = vld [vmem:[%s1 + $0x28] sm:$0xff]
  %v109 = vld [vmem:[%s1 + $0x30] sm:$0xff]
  %v110 = vld [vmem:[%s1 + $0x38] sm:$0xff]
  %v111 = vld [vmem:[%s1 + $0x40] sm:$0xff]
  %v112 = vld [vmem:[%s1 + $0x48] sm:$0xff]
  %v113 = vld [vmem:[%s1 + $0x50] sm:$0xff]
  %v114 = vld [vmem:[%s1 + $0x58] sm:$0xff]
  %v115 = vld [vmem:[%s1 + $0x60] sm:$0xff]
  %v116 = vld [vmem:[%s1 + $0x68] sm:$0xff]
  %v117 = vld [vmem:[%s1 + $0x70] sm:$0xff]
  %v118 = vld [vmem:[%s1 + $0x78] sm:$0xff]
  %v119 = vld [vmem:[%s2] sm:$0xff]
  %120 = vmatpush.msra.mxu0 %v118
  %121 = vmatpush.msra.mxu0 %v117
  %122 = vmatpush.msra.mxu0 %v116
  %123 = vmatpush.msra.mxu0 %v115
  %124 = vmatpush.msra.mxu0 %v114
  %125 = vmatpush.msra.mxu0 %v113
  %126 = vmatpush.msra.mxu0 %v112
  %127 = vmatpush.msra.mxu0 %v111
  %128 = vmatpush.msra.mxu0 %v110
  %129 = vmatpush.msra.mxu0 %v109
  %130 = vmatpush.msra.mxu0 %v108
  %131 = vmatpush.msra.mxu0 %v107
  %132 = vmatpush.msra.mxu0 %v106
  %133 = vmatpush.msra.mxu0 %v105
  %134 = vmatpush.msra.mxu0 %v104
  %135 = vmatpush.msra.mxu0 %v103
  %136 = vmatmul.f32.gmra.mxu0 %v101
  %v137 = vpop.f32.mrf.mxu0
  %v138 = vadd.f32 %v119, %v137
  %139 = vmatmul.f32.gmra.mxu0 %v102
  %v140 = vpop.f32.mrf.mxu0
  %v141 = vadd.f32 %v119, %v140
  %142 = vdwg.mxu0
  %v143 = vld [vmem:[%s3] sm:$0x1]
  %v144 = vperm.slane %v143, 0
  %v145 = vadd.f32 %v138, %v144
  %v146 = vadd.f32 %v141, %v144
  %v147 = vld [vmem:[%s4] sm:$0x1]
  %v148 = vld [vmem:[%s5] sm:$0x1]
  %vm149 = vcmask 261120
  %v150 = vsel %vm149, %v145, 0.0
  %151 = vadd.xlane.f32.xlu0 %v150
  %v152 = vpop.xlane.xlu0 %151
  %v153 = vsel %vm149, %v146, 0.0
  %154 = vadd.xlane.f32.xlu0 %v153
  %v155 = vpop.xlane.xlu0 %154
  %v156 = vrcp.pop 32.0
  %v157 = vmul.f32 32.0, %v156
  %v158 = vsub.f32 1.0, %v157
  %v159 = vmul.f32 %v156, %v158
  %v160 = vadd.f32 %v156, %v159
  %vm161 = vweird.f32 %v156
  %v162 = vsel %vm161, %v156, %v160
  %v163 = vmul.f32 %v152, %v162
  %v164 = vmul.f32 %v155, %v162
  %v165 = vmul.f32 %v145, %v145
  %v166 = vmul.f32 %v146, %v146
  %v167 = vsel %vm149, %v165, 0.0
  %168 = vadd.xlane.f32.xlu0 %v167
  %v169 = vpop.xlane.xlu0 %168
  %v170 = vsel %vm149, %v166, 0.0
  %171 = vadd.xlane.f32.xlu0 %v170
  %v172 = vpop.xlane.xlu0 %171
  %v173 = vmul.f32 %v169, %v162
  %v174 = vmul.f32 %v172, %v162
  %v175 = vmul.f32 %v163, %v163
  %v176 = vmul.f32 %v164, %v164
  %v177 = vsub.f32 %v173, %v175
  %v178 = vsub.f32 %v174, %v176
  %v179 = vsub.f32 %v145, %v163
  %v180 = vsub.f32 %v146, %v164
  %v181 = vadd.f32 %v177, 1e-12
  %v182 = vadd.f32 %v178, 1e-12
  %v183 = vrsqrt.pop %v181
  %v184 = vmul.f32 %v183, %v181
  %v185 = vmul.f32 %v184, %v183
  %v186 = vmul.f32 0.5, %v185
  %v187 = vsub.f32 1.5, %v186
  %v188 = vmul.f32 %v183, %v187
  %vm189 = vweird.f32 %v181
  %vm190 = vweird.f32 %v183
  %vm191 = vmor %vm189, %vm190
  %v192 = vsel %vm191, %v183, %v188
  %v193 = vrsqrt.pop %v182
  %v194 = vmul.f32 %v193, %v182
  %v195 = vmul.f32 %v194, %v193
  %v196 = vmul.f32 0.5, %v195
  %v197 = vsub.f32 1.5, %v196
  %v198 = vmul.f32 %v193, %v197
  %vm199 = vweird.f32 %v182
  %vm200 = vweird.f32 %v193
  %vm201 = vmor %vm199, %vm200
  %v202 = vsel %vm201, %v193, %v198
  %v203 = vmul.f32 %v179, %v192
  %v204 = vmul.f32 %v180, %v202
  %v206 = vperm.slane %v147, 0
  %v208 = vmul.f32 %v203, %v206
  %v209 = vmul.f32 %v204, %v206
  %v211 = vperm.slane %v148, 0
  %v213 = vadd.f32 %v208, %v211
  %v214 = vadd.f32 %v209, %v211
  %v215 = vld [vmem:[%s6] sm:$0xff]
  %v216 = vld [vmem:[%s6 + $0x8] sm:$0xff]
  %v217 = vld [vmem:[%s7] sm:$0xff]
  %v218 = vld [vmem:[%s7 + $0x8] sm:$0xff]
  %v219 = vld [vmem:[%s7 + $0x10] sm:$0xff]
  %v220 = vld [vmem:[%s7 + $0x18] sm:$0xff]
  %v221 = vld [vmem:[%s10] sm:$0x1]
  %v223 = vperm.slane %v221, 0
  %v226 = vsel %vm149, %v213, 0
  %v229 = vsel %vm149, %v214, 0
  %231 = vmatpush.msra.mxu0 0.0
  %232 = vmatpush.msra.mxu0 0.0
  %233 = vmatpush.msra.mxu0 0.0
  %234 = vmatpush.msra.mxu0 0.0
  %235 = vmatpush.msra.mxu0 0.0
  %236 = vmatpush.msra.mxu0 0.0
  %237 = vmatpush.msra.mxu0 0.0
  %238 = vmatpush.msra.mxu0 0.0
  %239 = vmatpush.msra.mxu0 0.0
  %240 = vmatpush.msra.mxu0 0.0
  %241 = vmatpush.msra.mxu0 0.0
  %242 = vmatpush.msra.mxu0 0.0
  %243 = vmatpush.msra.mxu0 %v220
  %244 = vmatpush.msra.mxu0 %v219
  %245 = vmatpush.msra.mxu0 %v218
  %246 = vmatpush.msra.mxu0 %v217
  %247 = vmatmul.f32.gmra.mxu0 %v226
  %v248 = vpop.f32.mrf.mxu0
  %v249 = vadd.f32 %v223, %v248
  %250 = vmatmul.f32.gmra.mxu0 %v229
  %v251 = vpop.f32.mrf.mxu0
  %v252 = vadd.f32 %v223, %v251
  %253 = vdwg.mxu0
  %v254 = vld [vmem:[%s8] sm:$0xff]
  %v255 = vld [vmem:[%s8 + $0x8] sm:$0xff]
  %v256 = vld [vmem:[%s8 + $0x10] sm:$0xff]
  %v257 = vld [vmem:[%s8 + $0x18] sm:$0xff]
  %v258 = vld [vmem:[%s11] sm:$0x1]
  %v260 = vperm.slane %v258, 0
  %262 = vmatpush.msra.mxu0 0.0
  %263 = vmatpush.msra.mxu0 0.0
  %264 = vmatpush.msra.mxu0 0.0
  %265 = vmatpush.msra.mxu0 0.0
  %266 = vmatpush.msra.mxu0 0.0
  %267 = vmatpush.msra.mxu0 0.0
  %268 = vmatpush.msra.mxu0 0.0
  %269 = vmatpush.msra.mxu0 0.0
  %270 = vmatpush.msra.mxu0 0.0
  %271 = vmatpush.msra.mxu0 0.0
  %272 = vmatpush.msra.mxu0 0.0
  %273 = vmatpush.msra.mxu0 0.0
  %274 = vmatpush.msra.mxu0 %v257
  %275 = vmatpush.msra.mxu0 %v256
  %276 = vmatpush.msra.mxu0 %v255
  %277 = vmatpush.msra.mxu0 %v254
  %278 = vmatmul.f32.gmra.mxu0 %v226
  %v279 = vpop.f32.mrf.mxu0
  %v280 = vadd.f32 %v260, %v279
  %281 = vmatmul.f32.gmra.mxu0 %v229
  %v282 = vpop.f32.mrf.mxu0
  %v283 = vadd.f32 %v260, %v282
  %284 = vdwg.mxu0
  %v285 = vld [vmem:[%s9] sm:$0xff]
  %v286 = vld [vmem:[%s9 + $0x8] sm:$0xff]
  %v287 = vld [vmem:[%s9 + $0x10] sm:$0xff]
  %v288 = vld [vmem:[%s9 + $0x18] sm:$0xff]
  %v289 = vld [vmem:[%s12] sm:$0x1]
  %v291 = vperm.slane %v289, 0
  %293 = vmatpush.msra.mxu0 0.0
  %294 = vmatpush.msra.mxu0 0.0
  %295 = vmatpush.msra.mxu0 0.0
  %296 = vmatpush.msra.mxu0 0.0
  %297 = vmatpush.msra.mxu0 0.0
  %298 = vmatpush.msra.mxu0 0.0
  %299 = vmatpush.msra.mxu0 0.0
  %300 = vmatpush.msra.mxu0 0.0
  %301 = vmatpush.msra.mxu0 0.0
  %302 = vmatpush.msra.mxu0 0.0
  %303 = vmatpush.msra.mxu0 0.0
  %304 = vmatpush.msra.mxu0 0.0
  %305 = vmatpush.msra.mxu0 %v288
  %306 = vmatpush.msra.mxu0 %v287
  %307 = vmatpush.msra.mxu0 %v286
  %308 = vmatpush.msra.mxu0 %v285
  %309 = vmatmul.f32.gmra.mxu0 %v226
  %v310 = vpop.f32.mrf.mxu0
  %v311 = vadd.f32 %v291, %v310
  %312 = vmatmul.f32.gmra.mxu0 %v229
  %v313 = vpop.f32.mrf.mxu0
  %v314 = vadd.f32 %v291, %v313
  %315 = vdwg.mxu0
  %vm316 = vcmask 130048
  %v318 = vsel %vm316, %v249, 0
  %v321 = vsel %vm316, %v252, 0
  %v324 = vsel %vm316, %v280, 0
  %v327 = vsel %vm316, %v283, 0
  %329 = vmatpush.xpose.msra.mxu0 0.0
  %330 = vmatpush.xpose.msra.mxu0 0.0
  %331 = vmatpush.xpose.msra.mxu0 0.0
  %332 = vmatpush.xpose.msra.mxu0 0.0
  %333 = vmatpush.xpose.msra.mxu0 0.0
  %334 = vmatpush.xpose.msra.mxu0 0.0
  %335 = vmatpush.xpose.msra.mxu0 0.0
  %336 = vmatpush.xpose.msra.mxu0 0.0
  %337 = vmatpush.xpose.msra.mxu0 0.0
  %338 = vmatpush.xpose.msra.mxu0 0.0
  %339 = vmatpush.xpose.msra.mxu0 0.0
  %340 = vmatpush.xpose.msra.mxu0 0.0
  %341 = vmatpush.xpose.msra.mxu0 0.0
  %342 = vmatpush.xpose.msra.mxu0 0.0
  %343 = vmatpush.xpose.msra.mxu0 %v327
  %344 = vmatpush.xpose.msra.mxu0 %v324
  %345 = vmatmul.f32.gmra.mxu0 %v318
  %v346 = vpop.f32.mrf.mxu0
  %v347 = vadd.f32 %v215, %v346
  %348 = vmatmul.f32.gmra.mxu0 %v321
  %v349 = vpop.f32.mrf.mxu0
  %v350 = vadd.f32 %v216, %v349
  %351 = vdwg.mxu0
  %v352 = vsel %vm316, %v347, -inf
  %353 = vmax.xlane.f32.xlu0 %v352
  %v354 = vpop.xlane.xlu0 %353
  %v355 = vsel %vm316, %v350, -inf
  %356 = vmax.xlane.f32.xlu0 %v355
  %v357 = vpop.xlane.xlu0 %356
  %v358 = vsub.f32 %v347, %v354
  %v359 = vsub.f32 %v350, %v357
  %v360 = vmul.f32 %v358, 1.442695
  %v361 = vpow.pop %v360
  %v362 = vmul.f32 %v359, 1.442695
  %v363 = vpow.pop %v362
  %v364 = vsel %vm316, %v361, 0.0
  %365 = vadd.xlane.f32.xlu0 %v364
  %v366 = vpop.xlane.xlu0 %365
  %v367 = vsel %vm316, %v363, 0.0
  %368 = vadd.xlane.f32.xlu0 %v367
  %v369 = vpop.xlane.xlu0 %368
  %v370 = vrcp.pop %v366
  %v371 = vrcp.pop %v369
  %v372 = vmul.f32 %v361, %v370
  %v373 = vmul.f32 %v363, %v371
  %v375 = vsel %vm316, %v372, 0
  %v378 = vsel %vm316, %v373, 0
  %380 = vmatpush.msra.mxu0 0.0
  %381 = vmatpush.msra.mxu0 0.0
  %382 = vmatpush.msra.mxu0 0.0
  %383 = vmatpush.msra.mxu0 0.0
  %384 = vmatpush.msra.mxu0 0.0
  %385 = vmatpush.msra.mxu0 0.0
  %386 = vmatpush.msra.mxu0 0.0
  %387 = vmatpush.msra.mxu0 0.0
  %388 = vmatpush.msra.mxu0 0.0
  %389 = vmatpush.msra.mxu0 0.0
  %390 = vmatpush.msra.mxu0 0.0
  %391 = vmatpush.msra.mxu0 0.0
  %392 = vmatpush.msra.mxu0 0.0
  %393 = vmatpush.msra.mxu0 0.0
  %394 = vmatpush.msra.mxu0 %v314
  %395 = vmatpush.msra.mxu0 %v311
  %396 = vmatmul.f32.gmra.mxu0 %v375
  %v397 = vpop.f32.mrf.mxu0
  %v398 = vadd.f32 0.0, %v397
  %399 = vmatmul.f32.gmra.mxu0 %v378
  %v400 = vpop.f32.mrf.mxu0
  %v401 = vadd.f32 0.0, %v400
  %402 = vdwg.mxu0
  %v403 = vld [vmem:[%s13] sm:$0xff]
  %v404 = vld [vmem:[%s13 + $0x8] sm:$0xff]
  %s405 = scalar_lea.vmem %s7, 32
  %v406 = vld [vmem:[%s405] sm:$0xff]
  %v407 = vld [vmem:[%s405 + $0x8] sm:$0xff]
  %v408 = vld [vmem:[%s405 + $0x10] sm:$0xff]
  %v409 = vld [vmem:[%s405 + $0x18] sm:$0xff]
  %s410 = scalar_lea.vmem %s10, 1
  %v411 = vld [vmem:[%s410] sm:$0x1]
  %v413 = vperm.slane %v411, 0
  %415 = vmatpush.msra.mxu0 0.0
  %416 = vmatpush.msra.mxu0 0.0
  %417 = vmatpush.msra.mxu0 0.0
  %418 = vmatpush.msra.mxu0 0.0
  %419 = vmatpush.msra.mxu0 0.0
  %420 = vmatpush.msra.mxu0 0.0
  %421 = vmatpush.msra.mxu0 0.0
  %422 = vmatpush.msra.mxu0 0.0
  %423 = vmatpush.msra.mxu0 0.0
  %424 = vmatpush.msra.mxu0 0.0
  %425 = vmatpush.msra.mxu0 0.0
  %426 = vmatpush.msra.mxu0 0.0
  %427 = vmatpush.msra.mxu0 %v409
  %428 = vmatpush.msra.mxu0 %v408
  %429 = vmatpush.msra.mxu0 %v407
  %430 = vmatpush.msra.mxu0 %v406
  %431 = vmatmul.f32.gmra.mxu0 %v226
  %v432 = vpop.f32.mrf.mxu0
  %v433 = vadd.f32 %v413, %v432
  %434 = vmatmul.f32.gmra.mxu0 %v229
  %v435 = vpop.f32.mrf.mxu0
  %v436 = vadd.f32 %v413, %v435
  %437 = vdwg.mxu0
  %s438 = scalar_lea.vmem %s8, 32
  %v439 = vld [vmem:[%s438] sm:$0xff]
  %v440 = vld [vmem:[%s438 + $0x8] sm:$0xff]
  %v441 = vld [vmem:[%s438 + $0x10] sm:$0xff]
  %v442 = vld [vmem:[%s438 + $0x18] sm:$0xff]
  %s443 = scalar_lea.vmem %s11, 1
  %v444 = vld [vmem:[%s443] sm:$0x1]
  %v446 = vperm.slane %v444, 0
  %448 = vmatpush.msra.mxu0 0.0
  %449 = vmatpush.msra.mxu0 0.0
  %450 = vmatpush.msra.mxu0 0.0
  %451 = vmatpush.msra.mxu0 0.0
  %452 = vmatpush.msra.mxu0 0.0
  %453 = vmatpush.msra.mxu0 0.0
  %454 = vmatpush.msra.mxu0 0.0
  %455 = vmatpush.msra.mxu0 0.0
  %456 = vmatpush.msra.mxu0 0.0
  %457 = vmatpush.msra.mxu0 0.0
  %458 = vmatpush.msra.mxu0 0.0
  %459 = vmatpush.msra.mxu0 0.0
  %460 = vmatpush.msra.mxu0 %v442
  %461 = vmatpush.msra.mxu0 %v441
  %462 = vmatpush.msra.mxu0 %v440
  %463 = vmatpush.msra.mxu0 %v439
  %464 = vmatmul.f32.gmra.mxu0 %v226
  %v465 = vpop.f32.mrf.mxu0
  %v466 = vadd.f32 %v446, %v465
  %467 = vmatmul.f32.gmra.mxu0 %v229
  %v468 = vpop.f32.mrf.mxu0
  %v469 = vadd.f32 %v446, %v468
  %470 = vdwg.mxu0
  %s471 = scalar_lea.vmem %s9, 32
  %v472 = vld [vmem:[%s471] sm:$0xff]
  %v473 = vld [vmem:[%s471 + $0x8] sm:$0xff]
  %v474 = vld [vmem:[%s471 + $0x10] sm:$0xff]
  %v475 = vld [vmem:[%s471 + $0x18] sm:$0xff]
  %s476 = scalar_lea.vmem %s12, 1
  %v477 = vld [vmem:[%s476] sm:$0x1]
  %v479 = vperm.slane %v477, 0
  %481 = vmatpush.msra.mxu0 0.0
  %482 = vmatpush.msra.mxu0 0.0
  %483 = vmatpush.msra.mxu0 0.0
  %484 = vmatpush.msra.mxu0 0.0
  %485 = vmatpush.msra.mxu0 0.0
  %486 = vmatpush.msra.mxu0 0.0
  %487 = vmatpush.msra.mxu0 0.0
  %488 = vmatpush.msra.mxu0 0.0
  %489 = vmatpush.msra.mxu0 0.0
  %490 = vmatpush.msra.mxu0 0.0
  %491 = vmatpush.msra.mxu0 0.0
  %492 = vmatpush.msra.mxu0 0.0
  %493 = vmatpush.msra.mxu0 %v475
  %494 = vmatpush.msra.mxu0 %v474
  %495 = vmatpush.msra.mxu0 %v473
  %496 = vmatpush.msra.mxu0 %v472
  %497 = vmatmul.f32.gmra.mxu0 %v226
  %v498 = vpop.f32.mrf.mxu0
  %v499 = vadd.f32 %v479, %v498
  %500 = vmatmul.f32.gmra.mxu0 %v229
  %v501 = vpop.f32.mrf.mxu0
  %v502 = vadd.f32 %v479, %v501
  %503 = vdwg.mxu0
  %v505 = vsel %vm316, %v433, 0
  %v508 = vsel %vm316, %v436, 0
  %v511 = vsel %vm316, %v466, 0
  %v514 = vsel %vm316, %v469, 0
  %516 = vmatpush.xpose.msra.mxu0 0.0
  %517 = vmatpush.xpose.msra.mxu0 0.0
  %518 = vmatpush.xpose.msra.mxu0 0.0
  %519 = vmatpush.xpose.msra.mxu0 0.0
  %520 = vmatpush.xpose.msra.mxu0 0.0
  %521 = vmatpush.xpose.msra.mxu0 0.0
  %522 = vmatpush.xpose.msra.mxu0 0.0
  %523 = vmatpush.xpose.msra.mxu0 0.0
  %524 = vmatpush.xpose.msra.mxu0 0.0
  %525 = vmatpush.xpose.msra.mxu0 0.0
  %526 = vmatpush.xpose.msra.mxu0 0.0
  %527 = vmatpush.xpose.msra.mxu0 0.0
  %528 = vmatpush.xpose.msra.mxu0 0.0
  %529 = vmatpush.xpose.msra.mxu0 0.0
  %530 = vmatpush.xpose.msra.mxu0 %v514
  %531 = vmatpush.xpose.msra.mxu0 %v511
  %532 = vmatmul.f32.gmra.mxu0 %v505
  %v533 = vpop.f32.mrf.mxu0
  %v534 = vadd.f32 %v215, %v533
  %535 = vmatmul.f32.gmra.mxu0 %v508
  %v536 = vpop.f32.mrf.mxu0
  %v537 = vadd.f32 %v216, %v536
  %538 = vdwg.mxu0
  %v539 = vsel %vm316, %v534, -inf
  %540 = vmax.xlane.f32.xlu0 %v539
  %v541 = vpop.xlane.xlu0 %540
  %v542 = vsel %vm316, %v537, -inf
  %543 = vmax.xlane.f32.xlu0 %v542
  %v544 = vpop.xlane.xlu0 %543
  %v545 = vsub.f32 %v534, %v541
  %v546 = vsub.f32 %v537, %v544
  %v547 = vmul.f32 %v545, 1.442695
  %v548 = vpow.pop %v547
  %v549 = vmul.f32 %v546, 1.442695
  %v550 = vpow.pop %v549
  %v551 = vsel %vm316, %v548, 0.0
  %552 = vadd.xlane.f32.xlu0 %v551
  %v553 = vpop.xlane.xlu0 %552
  %v554 = vsel %vm316, %v550, 0.0
  %555 = vadd.xlane.f32.xlu0 %v554
  %v556 = vpop.xlane.xlu0 %555
  %v557 = vrcp.pop %v553
  %v558 = vrcp.pop %v556
  %v559 = vmul.f32 %v548, %v557
  %v560 = vmul.f32 %v550, %v558
  %v562 = vsel %vm316, %v559, 0
  %v565 = vsel %vm316, %v560, 0
  %567 = vmatpush.msra.mxu0 0.0
  %568 = vmatpush.msra.mxu0 0.0
  %569 = vmatpush.msra.mxu0 0.0
  %570 = vmatpush.msra.mxu0 0.0
  %571 = vmatpush.msra.mxu0 0.0
  %572 = vmatpush.msra.mxu0 0.0
  %573 = vmatpush.msra.mxu0 0.0
  %574 = vmatpush.msra.mxu0 0.0
  %575 = vmatpush.msra.mxu0 0.0
  %576 = vmatpush.msra.mxu0 0.0
  %577 = vmatpush.msra.mxu0 0.0
  %578 = vmatpush.msra.mxu0 0.0
  %579 = vmatpush.msra.mxu0 0.0
  %580 = vmatpush.msra.mxu0 0.0
  %581 = vmatpush.msra.mxu0 %v502
  %582 = vmatpush.msra.mxu0 %v499
  %583 = vmatmul.f32.gmra.mxu0 %v562
  %v584 = vpop.f32.mrf.mxu0
  %v585 = vadd.f32 0.0, %v584
  %586 = vmatmul.f32.gmra.mxu0 %v565
  %v587 = vpop.f32.mrf.mxu0
  %v588 = vadd.f32 0.0, %v587
  %589 = vdwg.mxu0
  %s590 = scalar_lea.vmem %s13, 16
  %v591 = vld [vmem:[%s590] sm:$0xff]
  %v592 = vld [vmem:[%s590 + $0x8] sm:$0xff]
  %v594 = vsel %vm316, %v585, 0
  %v597 = vsel %vm316, %v588, 0
  %599 = vmatpush.msra.mxu0 0.0
  %600 = vmatpush.msra.mxu0 0.0
  %601 = vmatpush.msra.mxu0 0.0
  %602 = vmatpush.msra.mxu0 0.0
  %603 = vmatpush.msra.mxu0 0.0
  %604 = vmatpush.msra.mxu0 0.0
  %605 = vmatpush.msra.mxu0 0.0
  %606 = vmatpush.msra.mxu0 0.0
  %607 = vmatpush.msra.mxu0 0.0
  %608 = vmatpush.msra.mxu0 0.0
  %609 = vmatpush.msra.mxu0 0.0
  %610 = vmatpush.msra.mxu0 0.0
  %611 = vmatpush.msra.mxu0 0.0
  %612 = vmatpush.msra.mxu0 0.0
  %613 = vmatpush.msra.mxu0 %v592
  %614 = vmatpush.msra.mxu0 %v591
  %615 = vmatmul.f32.gmra.mxu0 %v594
  %v616 = vpop.f32.mrf.mxu0
  %v617 = vadd.f32 0.0, %v616
  %618 = vmatmul.f32.gmra.mxu0 %v597
  %v619 = vpop.f32.mrf.mxu0
  %v620 = vadd.f32 0.0, %v619
  %621 = vdwg.mxu0
  %v623 = vsel %vm316, %v398, 0
  %v626 = vsel %vm316, %v401, 0
  %628 = vmatpush.msra.mxu0 0.0
  %629 = vmatpush.msra.mxu0 0.0
  %630 = vmatpush.msra.mxu0 0.0
  %631 = vmatpush.msra.mxu0 0.0
  %632 = vmatpush.msra.mxu0 0.0
  %633 = vmatpush.msra.mxu0 0.0
  %634 = vmatpush.msra.mxu0 0.0
  %635 = vmatpush.msra.mxu0 0.0
  %636 = vmatpush.msra.mxu0 0.0
  %637 = vmatpush.msra.mxu0 0.0
  %638 = vmatpush.msra.mxu0 0.0
  %639 = vmatpush.msra.mxu0 0.0
  %640 = vmatpush.msra.mxu0 0.0
  %641 = vmatpush.msra.mxu0 0.0
  %642 = vmatpush.msra.mxu0 %v404
  %643 = vmatpush.msra.mxu0 %v403
  %644 = vmatmul.f32.gmra.mxu0 %v623
  %v645 = vpop.f32.mrf.mxu0
  %v646 = vadd.f32 %v617, %v645
  %647 = vmatmul.f32.gmra.mxu0 %v626
  %v648 = vpop.f32.mrf.mxu0
  %v649 = vadd.f32 %v620, %v648
  %650 = vdwg.mxu0
  %v651 = vld [vmem:[%s14] sm:$0x1]
  %v653 = vperm.slane %v651, 0
  %v655 = vadd.f32 %v646, %v653
  %v656 = vadd.f32 %v649, %v653
  %v657 = vadd.f32 %v655, %v213
  %v658 = vadd.f32 %v656, %v214
  %v659 = vld [vmem:[%s15] sm:$0x1]
  %v660 = vld [vmem:[%s16] sm:$0x1]
  %v661 = vsel %vm149, %v657, 0.0
  %662 = vadd.xlane.f32.xlu0 %v661
  %v663 = vpop.xlane.xlu0 %662
  %v664 = vsel %vm149, %v658, 0.0
  %665 = vadd.xlane.f32.xlu0 %v664
  %v666 = vpop.xlane.xlu0 %665
  %v667 = vmul.f32 %v663, %v162
  %v668 = vmul.f32 %v666, %v162
  %v669 = vmul.f32 %v657, %v657
  %v670 = vmul.f32 %v658, %v658
  %v671 = vsel %vm149, %v669, 0.0
  %672 = vadd.xlane.f32.xlu0 %v671
  %v673 = vpop.xlane.xlu0 %672
  %v674 = vsel %vm149, %v670, 0.0
  %675 = vadd.xlane.f32.xlu0 %v674
  %v676 = vpop.xlane.xlu0 %675
  %v677 = vmul.f32 %v673, %v162
  %v678 = vmul.f32 %v676, %v162
  %v679 = vmul.f32 %v667, %v667
  %v680 = vmul.f32 %v668, %v668
  %v681 = vsub.f32 %v677, %v679
  %v682 = vsub.f32 %v678, %v680
  %v683 = vsub.f32 %v657, %v667
  %v684 = vsub.f32 %v658, %v668
  %v685 = vadd.f32 %v681, 1e-12
  %v686 = vadd.f32 %v682, 1e-12
  %v687 = vrsqrt.pop %v685
  %v688 = vmul.f32 %v687, %v685
  %v689 = vmul.f32 %v688, %v687
  %v690 = vmul.f32 0.5, %v689
  %v691 = vsub.f32 1.5, %v690
  %v692 = vmul.f32 %v687, %v691
  %vm693 = vweird.f32 %v685
  %vm694 = vweird.f32 %v687
  %vm695 = vmor %vm693, %vm694
  %v696 = vsel %vm695, %v687, %v692
  %v697 = vrsqrt.pop %v686
  %v698 = vmul.f32 %v697, %v686
  %v699 = vmul.f32 %v698, %v697
  %v700 = vmul.f32 0.5, %v699
  %v701 = vsub.f32 1.5, %v700
  %v702 = vmul.f32 %v697, %v701
  %vm703 = vweird.f32 %v686
  %vm704 = vweird.f32 %v697
  %vm705 = vmor %vm703, %vm704
  %v706 = vsel %vm705, %v697, %v702
  %v707 = vmul.f32 %v683, %v696
  %v708 = vmul.f32 %v684, %v706
  %v710 = vperm.slane %v659, 0
  %v712 = vmul.f32 %v707, %v710
  %v713 = vmul.f32 %v708, %v710
  %v715 = vperm.slane %v660, 0
  %v717 = vadd.f32 %v712, %v715
  %v718 = vadd.f32 %v713, %v715
  %v719 = vld [vmem:[%s17] sm:$0xff]
  %v720 = vld [vmem:[%s17 + $0x8] sm:$0xff]
  %v721 = vld [vmem:[%s17 + $0x10] sm:$0xff]
  %v722 = vld [vmem:[%s17 + $0x18] sm:$0xff]
  %v723 = vld [vmem:[%s18] sm:$0x1]
  %v725 = vperm.slane %v723, 0
  %v728 = vsel %vm149, %v717, 0
  %v731 = vsel %vm149, %v718, 0
  %733 = vmatpush.msra.mxu0 0.0
  %734 = vmatpush.msra.mxu0 0.0
  %735 = vmatpush.msra.mxu0 0.0
  %736 = vmatpush.msra.mxu0 0.0
  %737 = vmatpush.msra.mxu0 0.0
  %738 = vmatpush.msra.mxu0 0.0
  %739 = vmatpush.msra.mxu0 0.0
  %740 = vmatpush.msra.mxu0 0.0
  %741 = vmatpush.msra.mxu0 0.0
  %742 = vmatpush.msra.mxu0 0.0
  %743 = vmatpush.msra.mxu0 0.0
  %744 = vmatpush.msra.mxu0 0.0
  %745 = vmatpush.msra.mxu0 %v722
  %746 = vmatpush.msra.mxu0 %v721
  %747 = vmatpush.msra.mxu0 %v720
  %748 = vmatpush.msra.mxu0 %v719
  %749 = vmatmul.f32.gmra.mxu0 %v728
  %v750 = vpop.f32.mrf.mxu0
  %v751 = vadd.f32 %v725, %v750
  %752 = vmatmul.f32.gmra.mxu0 %v731
  %v753 = vpop.f32.mrf.mxu0
  %v754 = vadd.f32 %v725, %v753
  %755 = vdwg.mxu0
  %v756 = vmul.f32 %v751, 0.5
  %v757 = vmul.f32 %v754, 0.5
  %v758 = vmul.f32 %v751, 0.044715
  %v759 = vmul.f32 %v754, 0.044715
  %v760 = vmul.f32 %v758, %v751
  %v761 = vmul.f32 %v759, %v754
  %v762 = vmul.f32 %v760, %v751
  %v763 = vmul.f32 %v761, %v754
  %v764 = vadd.f32 %v751, %v762
  %v765 = vadd.f32 %v754, %v763
  %v766 = vmul.f32 %v764, 0.7978846
  %v767 = vmul.f32 %v765, 0.7978846
  %v768 = vtanh.pop %v766
  %v769 = vtanh.pop %v767
  %v770 = vadd.f32 %v768, 1.0
  %v771 = vadd.f32 %v769, 1.0
  %v772 = vmul.f32 %v756, %v770
  %v773 = vmul.f32 %v757, %v771
  %v774 = vld [vmem:[%s19] sm:$0xff]
  %v775 = vld [vmem:[%s19 + $0x8] sm:$0xff]
  %v776 = vld [vmem:[%s19 + $0x10] sm:$0xff]
  %v777 = vld [vmem:[%s19 + $0x18] sm:$0xff]
  %v778 = vld [vmem:[%s19 + $0x20] sm:$0xff]
  %v779 = vld [vmem:[%s19 + $0x28] sm:$0xff]
  %v780 = vld [vmem:[%s19 + $0x30] sm:$0xff]
  %v781 = vld [vmem:[%s19 + $0x38] sm:$0xff]
  %v782 = vld [vmem:[%s20] sm:$0x1]
  %v784 = vperm.slane %v782, 0
  %vm786 = vcmask 523264
  %v788 = vsel %vm786, %v772, 0
  %v791 = vsel %vm786, %v773, 0
  %793 = vmatpush.msra.mxu0 0.0
  %794 = vmatpush.msra.mxu0 0.0
  %795 = vmatpush.msra.mxu0 0.0
  %796 = vmatpush.msra.mxu0 0.0
  %797 = vmatpush.msra.mxu0 0.0
  %798 = vmatpush.msra.mxu0 0.0
  %799 = vmatpush.msra.mxu0 0.0
  %800 = vmatpush.msra.mxu0 0.0
  %801 = vmatpush.msra.mxu0 %v781
  %802 = vmatpush.msra.mxu0 %v780
  %803 = vmatpush.msra.mxu0 %v779
  %804 = vmatpush.msra.mxu0 %v778
  %805 = vmatpush.msra.mxu0 %v777
  %806 = vmatpush.msra.mxu0 %v776
  %807 = vmatpush.msra.mxu0 %v775
  %808 = vmatpush.msra.mxu0 %v774
  %809 = vmatmul.f32.gmra.mxu0 %v788
  %v810 = vpop.f32.mrf.mxu0
  %v811 = vadd.f32 %v784, %v810
  %812 = vmatmul.f32.gmra.mxu0 %v791
  %v813 = vpop.f32.mrf.mxu0
  %v814 = vadd.f32 %v784, %v813
  %815 = vdwg.mxu0
  %v816 = vadd.f32 %v811, %v717
  %v817 = vadd.f32 %v814, %v718
  %v818 = vld [vmem:[%s21] sm:$0x1]
  %v819 = vld [vmem:[%s22] sm:$0x1]
  %v820 = vsel %vm149, %v816, 0.0
  %821 = vadd.xlane.f32.xlu0 %v820
  %v822 = vpop.xlane.xlu0 %821
  %v823 = vsel %vm149, %v817, 0.0
  %824 = vadd.xlane.f32.xlu0 %v823
  %v825 = vpop.xlane.xlu0 %824
  %v826 = vmul.f32 %v822, %v162
  %v827 = vmul.f32 %v825, %v162
  %v828 = vmul.f32 %v816, %v816
  %v829 = vmul.f32 %v817, %v817
  %v830 = vsel %vm149, %v828, 0.0
  %831 = vadd.xlane.f32.xlu0 %v830
  %v832 = vpop.xlane.xlu0 %831
  %v833 = vsel %vm149, %v829, 0.0
  %834 = vadd.xlane.f32.xlu0 %v833
  %v835 = vpop.xlane.xlu0 %834
  %v836 = vmul.f32 %v832, %v162
  %v837 = vmul.f32 %v835, %v162
  %v838 = vmul.f32 %v826, %v826
  %v839 = vmul.f32 %v827, %v827
  %v840 = vsub.f32 %v836, %v838
  %v841 = vsub.f32 %v837, %v839
  %v842 = vsub.f32 %v816, %v826
  %v843 = vsub.f32 %v817, %v827
  %v844 = vadd.f32 %v840, 1e-12
  %v845 = vadd.f32 %v841, 1e-12
  %v846 = vrsqrt.pop %v844
  %v847 = vmul.f32 %v846, %v844
  %v848 = vmul.f32 %v847, %v846
  %v849 = vmul.f32 0.5, %v848
  %v850 = vsub.f32 1.5, %v849
  %v851 = vmul.f32 %v846, %v850
  %vm852 = vweird.f32 %v844
  %vm853 = vweird.f32 %v846
  %vm854 = vmor %vm852, %vm853
  %v855 = vsel %vm854, %v846, %v851
  %v856 = vrsqrt.pop %v845
  %v857 = vmul.f32 %v856, %v845
  %v858 = vmul.f32 %v857, %v856
  %v859 = vmul.f32 0.5, %v858
  %v860 = vsub.f32 1.5, %v859
  %v861 = vmul.f32 %v856, %v860
  %vm862 = vweird.f32 %v845
  %vm863 = vweird.f32 %v856
  %vm864 = vmor %vm862, %vm863
  %v865 = vsel %vm864, %v856, %v861
  %v866 = vmul.f32 %v842, %v855
  %v867 = vmul.f32 %v843, %v865
  %v869 = vperm.slane %v818, 0
  %v871 = vmul.f32 %v866, %v869
  %v872 = vmul.f32 %v867, %v869
  %v874 = vperm.slane %v819, 0
  %v876 = vadd.f32 %v871, %v874
  %v877 = vadd.f32 %v872, %v874
  %s878 = scalar_lea.vmem %s7, 64
  %v879 = vld [vmem:[%s878] sm:$0xff]
  %v880 = vld [vmem:[%s878 + $0x8] sm:$0xff]
  %v881 = vld [vmem:[%s878 + $0x10] sm:$0xff]
  %v882 = vld [vmem:[%s878 + $0x18] sm:$0xff]
  %s883 = scalar_lea.vmem %s10, 2
  %v884 = vld [vmem:[%s883] sm:$0x1]
  %v886 = vperm.slane %v884, 0
  %v889 = vsel %vm149, %v876, 0
  %v892 = vsel %vm149, %v877, 0
  %894 = vmatpush.msra.mxu0 0.0
  %895 = vmatpush.msra.mxu0 0.0
  %896 = vmatpush.msra.mxu0 0.0
  %897 = vmatpush.msra.mxu0 0.0
  %898 = vmatpush.msra.mxu0 0.0
  %899 = vmatpush.msra.mxu0 0.0
  %900 = vmatpush.msra.mxu0 0.0
  %901 = vmatpush.msra.mxu0 0.0
  %902 = vmatpush.msra.mxu0 0.0
  %903 = vmatpush.msra.mxu0 0.0
  %904 = vmatpush.msra.mxu0 0.0
  %905 = vmatpush.msra.mxu0 0.0
  %906 = vmatpush.msra.mxu0 %v882
  %907 = vmatpush.msra.mxu0 %v881
  %908 = vmatpush.msra.mxu0 %v880
  %909 = vmatpush.msra.mxu0 %v879
  %910 = vmatmul.f32.gmra.mxu0 %v889
  %v911 = vpop.f32.mrf.mxu0
  %v912 = vadd.f32 %v886, %v911
  %913 = vmatmul.f32.gmra.mxu0 %v892
  %v914 = vpop.f32.mrf.mxu0
  %v915 = vadd.f32 %v886, %v914
  %916 = vdwg.mxu0
  %s917 = scalar_lea.vmem %s8, 64
  %v918 = vld [vmem:[%s917] sm:$0xff]
  %v919 = vld [vmem:[%s917 + $0x8] sm:$0xff]
  %v920 = vld [vmem:[%s917 + $0x10] sm:$0xff]
  %v921 = vld [vmem:[%s917 + $0x18] sm:$0xff]
  %s922 = scalar_lea.vmem %s11, 2
  %v923 = vld [vmem:[%s922] sm:$0x1]
  %v925 = vperm.slane %v923, 0
  %927 = vmatpush.msra.mxu0 0.0
  %928 = vmatpush.msra.mxu0 0.0
  %929 = vmatpush.msra.mxu0 0.0
  %930 = vmatpush.msra.mxu0 0.0
  %931 = vmatpush.msra.mxu0 0.0
  %932 = vmatpush.msra.mxu0 0.0
  %933 = vmatpush.msra.mxu0 0.0
  %934 = vmatpush.msra.mxu0 0.0
  %935 = vmatpush.msra.mxu0 0.0
  %936 = vmatpush.msra.mxu0 0.0
  %937 = vmatpush.msra.mxu0 0.0
  %938 = vmatpush.msra.mxu0 0.0
  %939 = vmatpush.msra.mxu0 %v921
  %940 = vmatpush.msra.mxu0 %v920
  %941 = vmatpush.msra.mxu0 %v919
  %942 = vmatpush.msra.mxu0 %v918
  %943 = vmatmul.f32.gmra.mxu0 %v889
  %v944 = vpop.f32.mrf.mxu0
  %v945 = vadd.f32 %v925, %v944
  %946 = vmatmul.f32.gmra.mxu0 %v892
  %v947 = vpop.f32.mrf.mxu0
  %v948 = vadd.f32 %v925, %v947
  %949 = vdwg.mxu0
  %s950 = scalar_lea.vmem %s9, 64
  %v951 = vld [vmem:[%s950] sm:$0xff]
  %v952 = vld [vmem:[%s950 + $0x8] sm:$0xff]
  %v953 = vld [vmem:[%s950 + $0x10] sm:$0xff]
  %v954 = vld [vmem:[%s950 + $0x18] sm:$0xff]
  %s955 = scalar_lea.vmem %s12, 2
  %v956 = vld [vmem:[%s955] sm:$0x1]
  %v958 = vperm.slane %v956, 0
  %960 = vmatpush.msra.mxu0 0.0
  %961 = vmatpush.msra.mxu0 0.0
  %962 = vmatpush.msra.mxu0 0.0
  %963 = vmatpush.msra.mxu0 0.0
  %964 = vmatpush.msra.mxu0 0.0
  %965 = vmatpush.msra.mxu0 0.0
  %966 = vmatpush.msra.mxu0 0.0
  %967 = vmatpush.msra.mxu0 0.0
  %968 = vmatpush.msra.mxu0 0.0
  %969 = vmatpush.msra.mxu0 0.0
  %970 = vmatpush.msra.mxu0 0.0
  %971 = vmatpush.msra.mxu0 0.0
  %972 = vmatpush.msra.mxu0 %v954
  %973 = vmatpush.msra.mxu0 %v953
  %974 = vmatpush.msra.mxu0 %v952
  %975 = vmatpush.msra.mxu0 %v951
  %976 = vmatmul.f32.gmra.mxu0 %v889
  %v977 = vpop.f32.mrf.mxu0
  %v978 = vadd.f32 %v958, %v977
  %979 = vmatmul.f32.gmra.mxu0 %v892
  %v980 = vpop.f32.mrf.mxu0
  %v981 = vadd.f32 %v958, %v980
  %982 = vdwg.mxu0
  %v984 = vsel %vm316, %v912, 0
  %v987 = vsel %vm316, %v915, 0
  %v990 = vsel %vm316, %v945, 0
  %v993 = vsel %vm316, %v948, 0
  %995 = vmatpush.xpose.msra.mxu0 0.0
  %996 = vmatpush.xpose.msra.mxu0 0.0
  %997 = vmatpush.xpose.msra.mxu0 0.0
  %998 = vmatpush.xpose.msra.mxu0 0.0
  %999 = vmatpush.xpose.msra.mxu0 0.0
  %1000 = vmatpush.xpose.msra.mxu0 0.0
  %1001 = vmatpush.xpose.msra.mxu0 0.0
  %1002 = vmatpush.xpose.msra.mxu0 0.0
  %1003 = vmatpush.xpose.msra.mxu0 0.0
  %1004 = vmatpush.xpose.msra.mxu0 0.0
  %1005 = vmatpush.xpose.msra.mxu0 0.0
  %1006 = vmatpush.xpose.msra.mxu0 0.0
  %1007 = vmatpush.xpose.msra.mxu0 0.0
  %1008 = vmatpush.xpose.msra.mxu0 0.0
  %1009 = vmatpush.xpose.msra.mxu0 %v993
  %1010 = vmatpush.xpose.msra.mxu0 %v990
  %1011 = vmatmul.f32.gmra.mxu0 %v984
  %v1012 = vpop.f32.mrf.mxu0
  %v1013 = vadd.f32 %v215, %v1012
  %1014 = vmatmul.f32.gmra.mxu0 %v987
  %v1015 = vpop.f32.mrf.mxu0
  %v1016 = vadd.f32 %v216, %v1015
  %1017 = vdwg.mxu0
  %v1018 = vsel %vm316, %v1013, -inf
  %1019 = vmax.xlane.f32.xlu0 %v1018
  %v1020 = vpop.xlane.xlu0 %1019
  %v1021 = vsel %vm316, %v1016, -inf
  %1022 = vmax.xlane.f32.xlu0 %v1021
  %v1023 = vpop.xlane.xlu0 %1022
  %v1024 = vsub.f32 %v1013, %v1020
  %v1025 = vsub.f32 %v1016, %v1023
  %v1026 = vmul.f32 %v1024, 1.442695
  %v1027 = vpow.pop %v1026
  %v1028 = vmul.f32 %v1025, 1.442695
  %v1029 = vpow.pop %v1028
  %v1030 = vsel %vm316, %v1027, 0.0
  %1031 = vadd.xlane.f32.xlu0 %v1030
  %v1032 = vpop.xlane.xlu0 %1031
  %v1033 = vsel %vm316, %v1029, 0.0
  %1034 = vadd.xlane.f32.xlu0 %v1033
  %v1035 = vpop.xlane.xlu0 %1034
  %v1036 = vrcp.pop %v1032
  %v1037 = vrcp.pop %v1035
  %v1038 = vmul.f32 %v1027, %v1036
  %v1039 = vmul.f32 %v1029, %v1037
  %v1041 = vsel %vm316, %v1038, 0
  %v1044 = vsel %vm316, %v1039, 0
  %1046 = vmatpush.msra.mxu0 0.0
  %1047 = vmatpush.msra.mxu0 0.0
  %1048 = vmatpush.msra.mxu0 0.0
  %1049 = vmatpush.msra.mxu0 0.0
  %1050 = vmatpush.msra.mxu0 0.0
  %1051 = vmatpush.msra.mxu0 0.0
  %1052 = vmatpush.msra.mxu0 0.0
  %1053 = vmatpush.msra.mxu0 0.0
  %1054 = vmatpush.msra.mxu0 0.0
  %1055 = vmatpush.msra.mxu0 0.0
  %1056 = vmatpush.msra.mxu0 0.0
  %1057 = vmatpush.msra.mxu0 0.0
  %1058 = vmatpush.msra.mxu0 0.0
  %1059 = vmatpush.msra.mxu0 0.0
  %1060 = vmatpush.msra.mxu0 %v981
  %1061 = vmatpush.msra.mxu0 %v978
  %1062 = vmatmul.f32.gmra.mxu0 %v1041
  %v1063 = vpop.f32.mrf.mxu0
  %v1064 = vadd.f32 0.0, %v1063
  %1065 = vmatmul.f32.gmra.mxu0 %v1044
  %v1066 = vpop.f32.mrf.mxu0
  %v1067 = vadd.f32 0.0, %v1066
  %1068 = vdwg.mxu0
  %s1069 = scalar_lea.vmem %s13, 32
  %v1070 = vld [vmem:[%s1069] sm:$0xff]
  %v1071 = vld [vmem:[%s1069 + $0x8] sm:$0xff]
  %s1072 = scalar_lea.vmem %s7, 96
  %v1073 = vld [vmem:[%s1072] sm:$0xff]
  %v1074 = vld [vmem:[%s1072 + $0x8] sm:$0xff]
  %v1075 = vld [vmem:[%s1072 + $0x10] sm:$0xff]
  %v1076 = vld [vmem:[%s1072 + $0x18] sm:$0xff]
  %s1077 = scalar_lea.vmem %s10, 3
  %v1078 = vld [vmem:[%s1077] sm:$0x1]
  %v1080 = vperm.slane %v1078, 0
  %1082 = vmatpush.msra.mxu0 0.0
  %1083 = vmatpush.msra.mxu0 0.0
  %1084 = vmatpush.msra.mxu0 0.0
  %1085 = vmatpush.msra.mxu0 0.0
  %1086 = vmatpush.msra.mxu0 0.0
  %1087 = vmatpush.msra.mxu0 0.0
  %1088 = vmatpush.msra.mxu0 0.0
  %1089 = vmatpush.msra.mxu0 0.0
  %1090 = vmatpush.msra.mxu0 0.0
  %1091 = vmatpush.msra.mxu0 0.0
  %1092 = vmatpush.msra.mxu0 0.0
  %1093 = vmatpush.msra.mxu0 0.0
  %1094 = vmatpush.msra.mxu0 %v1076
  %1095 = vmatpush.msra.mxu0 %v1075
  %1096 = vmatpush.msra.mxu0 %v1074
  %1097 = vmatpush.msra.mxu0 %v1073
  %1098 = vmatmul.f32.gmra.mxu0 %v889
  %v1099 = vpop.f32.mrf.mxu0
  %v1100 = vadd.f32 %v1080, %v1099
  %1101 = vmatmul.f32.gmra.mxu0 %v892
  %v1102 = vpop.f32.mrf.mxu0
  %v1103 = vadd.f32 %v1080, %v1102
  %1104 = vdwg.mxu0
  %s1105 = scalar_lea.vmem %s8, 96
  %v1106 = vld [vmem:[%s1105] sm:$0xff]
  %v1107 = vld [vmem:[%s1105 + $0x8] sm:$0xff]
  %v1108 = vld [vmem:[%s1105 + $0x10] sm:$0xff]
  %v1109 = vld [vmem:[%s1105 + $0x18] sm:$0xff]
  %s1110 = scalar_lea.vmem %s11, 3
  %v1111 = vld [vmem:[%s1110] sm:$0x1]
  %v1113 = vperm.slane %v1111, 0
  %1115 = vmatpush.msra.mxu0 0.0
  %1116 = vmatpush.msra.mxu0 0.0
  %1117 = vmatpush.msra.mxu0 0.0
  %1118 = vmatpush.msra.mxu0 0.0
  %1119 = vmatpush.msra.mxu0 0.0
  %1120 = vmatpush.msra.mxu0 0.0
  %1121 = vmatpush.msra.mxu0 0.0
  %1122 = vmatpush.msra.mxu0 0.0
  %1123 = vmatpush.msra.mxu0 0.0
  %1124 = vmatpush.msra.mxu0 0.0
  %1125 = vmatpush.msra.mxu0 0.0
  %1126 = vmatpush.msra.mxu0 0.0
  %1127 = vmatpush.msra.mxu0 %v1109
  %1128 = vmatpush.msra.mxu0 %v1108
  %1129 = vmatpush.msra.mxu0 %v1107
  %1130 = vmatpush.msra.mxu0 %v1106
  %1131 = vmatmul.f32.gmra.mxu0 %v889
  %v1132 = vpop.f32.mrf.mxu0
  %v1133 = vadd.f32 %v1113, %v1132
  %1134 = vmatmul.f32.gmra.mxu0 %v892
  %v1135 = vpop.f32.mrf.mxu0
  %v1136 = vadd.f32 %v1113, %v1135
  %1137 = vdwg.mxu0
  %s1138 = scalar_lea.vmem %s9, 96
  %v1139 = vld [vmem:[%s1138] sm:$0xff]
  %v1140 = vld [vmem:[%s1138 + $0x8] sm:$0xff]
  %v1141 = vld [vmem:[%s1138 + $0x10] sm:$0xff]
  %v1142 = vld [vmem:[%s1138 + $0x18] sm:$0xff]
  %s1143 = scalar_lea.vmem %s12, 3
  %v1144 = vld [vmem:[%s1143] sm:$0x1]
  %v1146 = vperm.slane %v1144, 0
  %1148 = vmatpush.msra.mxu0 0.0
  %1149 = vmatpush.msra.mxu0 0.0
  %1150 = vmatpush.msra.mxu0 0.0
  %1151 = vmatpush.msra.mxu0 0.0
  %1152 = vmatpush.msra.mxu0 0.0
  %1153 = vmatpush.msra.mxu0 0.0
  %1154 = vmatpush.msra.mxu0 0.0
  %1155 = vmatpush.msra.mxu0 0.0
  %1156 = vmatpush.msra.mxu0 0.0
  %1157 = vmatpush.msra.mxu0 0.0
  %1158 = vmatpush.msra.mxu0 0.0
  %1159 = vmatpush.msra.mxu0 0.0
  %1160 = vmatpush.msra.mxu0 %v1142
  %1161 = vmatpush.msra.mxu0 %v1141
  %1162 = vmatpush.msra.mxu0 %v1140
  %1163 = vmatpush.msra.mxu0 %v1139
  %1164 = vmatmul.f32.gmra.mxu0 %v889
  %v1165 = vpop.f32.mrf.mxu0
  %v1166 = vadd.f32 %v1146, %v1165
  %1167 = vmatmul.f32.gmra.mxu0 %v892
  %v1168 = vpop.f32.mrf.mxu0
  %v1169 = vadd.f32 %v1146, %v1168
  %1170 = vdwg.mxu0
  %v1172 = vsel %vm316, %v1100, 0
  %v1175 = vsel %vm316, %v1103, 0
  %v1178 = vsel %vm316, %v1133, 0
  %v1181 = vsel %vm316, %v1136, 0
  %1183 = vmatpush.xpose.msra.mxu0 0.0
  %1184 = vmatpush.xpose.msra.mxu0 0.0
  %1185 = vmatpush.xpose.msra.mxu0 0.0
  %1186 = vmatpush.xpose.msra.mxu0 0.0
  %1187 = vmatpush.xpose.msra.mxu0 0.0
  %1188 = vmatpush.xpose.msra.mxu0 0.0
  %1189 = vmatpush.xpose.msra.mxu0 0.0
  %1190 = vmatpush.xpose.msra.mxu0 0.0
  %1191 = vmatpush.xpose.msra.mxu0 0.0
  %1192 = vmatpush.xpose.msra.mxu0 0.0
  %1193 = vmatpush.xpose.msra.mxu0 0.0
  %1194 = vmatpush.xpose.msra.mxu0 0.0
  %1195 = vmatpush.xpose.msra.mxu0 0.0
  %1196 = vmatpush.xpose.msra.mxu0 0.0
  %1197 = vmatpush.xpose.msra.mxu0 %v1181
  %1198 = vmatpush.xpose.msra.mxu0 %v1178
  %1199 = vmatmul.f32.gmra.mxu0 %v1172
  %v1200 = vpop.f32.mrf.mxu0
  %v1201 = vadd.f32 %v215, %v1200
  %1202 = vmatmul.f32.gmra.mxu0 %v1175
  %v1203 = vpop.f32.mrf.mxu0
  %v1204 = vadd.f32 %v216, %v1203
  %1205 = vdwg.mxu0
  %v1206 = vsel %vm316, %v1201, -inf
  %1207 = vmax.xlane.f32.xlu0 %v1206
  %v1208 = vpop.xlane.xlu0 %1207
  %v1209 = vsel %vm316, %v1204, -inf
  %1210 = vmax.xlane.f32.xlu0 %v1209
  %v1211 = vpop.xlane.xlu0 %1210
  %v1212 = vsub.f32 %v1201, %v1208
  %v1213 = vsub.f32 %v1204, %v1211
  %v1214 = vmul.f32 %v1212, 1.442695
  %v1215 = vpow.pop %v1214
  %v1216 = vmul.f32 %v1213, 1.442695
  %v1217 = vpow.pop %v1216
  %v1218 = vsel %vm316, %v1215, 0.0
  %1219 = vadd.xlane.f32.xlu0 %v1218
  %v1220 = vpop.xlane.xlu0 %1219
  %v1221 = vsel %vm316, %v1217, 0.0
  %1222 = vadd.xlane.f32.xlu0 %v1221
  %v1223 = vpop.xlane.xlu0 %1222
  %v1224 = vrcp.pop %v1220
  %v1225 = vrcp.pop %v1223
  %v1226 = vmul.f32 %v1215, %v1224
  %v1227 = vmul.f32 %v1217, %v1225
  %v1229 = vsel %vm316, %v1226, 0
  %v1232 = vsel %vm316, %v1227, 0
  %1234 = vmatpush.msra.mxu0 0.0
  %1235 = vmatpush.msra.mxu0 0.0
  %1236 = vmatpush.msra.mxu0 0.0
  %1237 = vmatpush.msra.mxu0 0.0
  %1238 = vmatpush.msra.mxu0 0.0
  %1239 = vmatpush.msra.mxu0 0.0
  %1240 = vmatpush.msra.mxu0 0.0
  %1241 = vmatpush.msra.mxu0 0.0
  %1242 = vmatpush.msra.mxu0 0.0
  %1243 = vmatpush.msra.mxu0 0.0
  %1244 = vmatpush.msra.mxu0 0.0
  %1245 = vmatpush.msra.mxu0 0.0
  %1246 = vmatpush.msra.mxu0 0.0
  %1247 = vmatpush.msra.mxu0 0.0
  %1248 = vmatpush.msra.mxu0 %v1169
  %1249 = vmatpush.msra.mxu0 %v1166
  %1250 = vmatmul.f32.gmra.mxu0 %v1229
  %v1251 = vpop.f32.mrf.mxu0
  %v1252 = vadd.f32 0.0, %v1251
  %1253 = vmatmul.f32.gmra.mxu0 %v1232
  %v1254 = vpop.f32.mrf.mxu0
  %v1255 = vadd.f32 0.0, %v1254
  %1256 = vdwg.mxu0
  %s1257 = scalar_lea.vmem %s13, 48
  %v1258 = vld [vmem:[%s1257] sm:$0xff]
  %v1259 = vld [vmem:[%s1257 + $0x8] sm:$0xff]
  %v1261 = vsel %vm316, %v1252, 0
  %v1264 = vsel %vm316, %v1255, 0
  %1266 = vmatpush.msra.mxu0 0.0
  %1267 = vmatpush.msra.mxu0 0.0
  %1268 = vmatpush.msra.mxu0 0.0
  %1269 = vmatpush.msra.mxu0 0.0
  %1270 = vmatpush.msra.mxu0 0.0
  %1271 = vmatpush.msra.mxu0 0.0
  %1272 = vmatpush.msra.mxu0 0.0
  %1273 = vmatpush.msra.mxu0 0.0
  %1274 = vmatpush.msra.mxu0 0.0
  %1275 = vmatpush.msra.mxu0 0.0
  %1276 = vmatpush.msra.mxu0 0.0
  %1277 = vmatpush.msra.mxu0 0.0
  %1278 = vmatpush.msra.mxu0 0.0
  %1279 = vmatpush.msra.mxu0 0.0
  %1280 = vmatpush.msra.mxu0 %v1259
  %1281 = vmatpush.msra.mxu0 %v1258
  %1282 = vmatmul.f32.gmra.mxu0 %v1261
  %v1283 = vpop.f32.mrf.mxu0
  %v1284 = vadd.f32 0.0, %v1283
  %1285 = vmatmul.f32.gmra.mxu0 %v1264
  %v1286 = vpop.f32.mrf.mxu0
  %v1287 = vadd.f32 0.0, %v1286
  %1288 = vdwg.mxu0
  %v1290 = vsel %vm316, %v1064, 0
  %v1293 = vsel %vm316, %v1067, 0
  %1295 = vmatpush.msra.mxu0 0.0
  %1296 = vmatpush.msra.mxu0 0.0
  %1297 = vmatpush.msra.mxu0 0.0
  %1298 = vmatpush.msra.mxu0 0.0
  %1299 = vmatpush.msra.mxu0 0.0
  %1300 = vmatpush.msra.mxu0 0.0
  %1301 = vmatpush.msra.mxu0 0.0
  %1302 = vmatpush.msra.mxu0 0.0
  %1303 = vmatpush.msra.mxu0 0.0
  %1304 = vmatpush.msra.mxu0 0.0
  %1305 = vmatpush.msra.mxu0 0.0
  %1306 = vmatpush.msra.mxu0 0.0
  %1307 = vmatpush.msra.mxu0 0.0
  %1308 = vmatpush.msra.mxu0 0.0
  %1309 = vmatpush.msra.mxu0 %v1071
  %1310 = vmatpush.msra.mxu0 %v1070
  %1311 = vmatmul.f32.gmra.mxu0 %v1290
  %v1312 = vpop.f32.mrf.mxu0
  %v1313 = vadd.f32 %v1284, %v1312
  %1314 = vmatmul.f32.gmra.mxu0 %v1293
  %v1315 = vpop.f32.mrf.mxu0
  %v1316 = vadd.f32 %v1287, %v1315
  %1317 = vdwg.mxu0
  %s1318 = scalar_lea.vmem %s14, 1
  %v1319 = vld [vmem:[%s1318] sm:$0x1]
  %v1321 = vperm.slane %v1319, 0
  %v1323 = vadd.f32 %v1313, %v1321
  %v1324 = vadd.f32 %v1316, %v1321
  %v1325 = vadd.f32 %v1323, %v876
  %v1326 = vadd.f32 %v1324, %v877
  %s1327 = scalar_lea.vmem %s15, 1
  %v1328 = vld [vmem:[%s1327] sm:$0x1]
  %s1329 = scalar_lea.vmem %s16, 1
  %v1330 = vld [vmem:[%s1329] sm:$0x1]
  %v1331 = vsel %vm149, %v1325, 0.0
  %1332 = vadd.xlane.f32.xlu0 %v1331
  %v1333 = vpop.xlane.xlu0 %1332
  %v1334 = vsel %vm149, %v1326, 0.0
  %1335 = vadd.xlane.f32.xlu0 %v1334
  %v1336 = vpop.xlane.xlu0 %1335
  %v1337 = vmul.f32 %v1333, %v162
  %v1338 = vmul.f32 %v1336, %v162
  %v1339 = vmul.f32 %v1325, %v1325
  %v1340 = vmul.f32 %v1326, %v1326
  %v1341 = vsel %vm149, %v1339, 0.0
  %1342 = vadd.xlane.f32.xlu0 %v1341
  %v1343 = vpop.xlane.xlu0 %1342
  %v1344 = vsel %vm149, %v1340, 0.0
  %1345 = vadd.xlane.f32.xlu0 %v1344
  %v1346 = vpop.xlane.xlu0 %1345
  %v1347 = vmul.f32 %v1343, %v162
  %v1348 = vmul.f32 %v1346, %v162
  %v1349 = vmul.f32 %v1337, %v1337
  %v1350 = vmul.f32 %v1338, %v1338
  %v1351 = vsub.f32 %v1347, %v1349
  %v1352 = vsub.f32 %v1348, %v1350
  %v1353 = vsub.f32 %v1325, %v1337
  %v1354 = vsub.f32 %v1326, %v1338
  %v1355 = vadd.f32 %v1351, 1e-12
  %v1356 = vadd.f32 %v1352, 1e-12
  %v1357 = vrsqrt.pop %v1355
  %v1358 = vmul.f32 %v1357, %v1355
  %v1359 = vmul.f32 %v1358, %v1357
  %v1360 = vmul.f32 0.5, %v1359
  %v1361 = vsub.f32 1.5, %v1360
  %v1362 = vmul.f32 %v1357, %v1361
  %vm1363 = vweird.f32 %v1355
  %vm1364 = vweird.f32 %v1357
  %vm1365 = vmor %vm1363, %vm1364
  %v1366 = vsel %vm1365, %v1357, %v1362
  %v1367 = vrsqrt.pop %v1356
  %v1368 = vmul.f32 %v1367, %v1356
  %v1369 = vmul.f32 %v1368, %v1367
  %v1370 = vmul.f32 0.5, %v1369
  %v1371 = vsub.f32 1.5, %v1370
  %v1372 = vmul.f32 %v1367, %v1371
  %vm1373 = vweird.f32 %v1356
  %vm1374 = vweird.f32 %v1367
  %vm1375 = vmor %vm1373, %vm1374
  %v1376 = vsel %vm1375, %v1367, %v1372
  %v1377 = vmul.f32 %v1353, %v1366
  %v1378 = vmul.f32 %v1354, %v1376
  %v1380 = vperm.slane %v1328, 0
  %v1382 = vmul.f32 %v1377, %v1380
  %v1383 = vmul.f32 %v1378, %v1380
  %v1385 = vperm.slane %v1330, 0
  %v1387 = vadd.f32 %v1382, %v1385
  %v1388 = vadd.f32 %v1383, %v1385
  %s1389 = scalar_lea.vmem %s17, 32
  %v1390 = vld [vmem:[%s1389] sm:$0xff]
  %v1391 = vld [vmem:[%s1389 + $0x8] sm:$0xff]
  %v1392 = vld [vmem:[%s1389 + $0x10] sm:$0xff]
  %v1393 = vld [vmem:[%s1389 + $0x18] sm:$0xff]
  %s1394 = scalar_lea.vmem %s18, 1
  %v1395 = vld [vmem:[%s1394] sm:$0x1]
  %v1397 = vperm.slane %v1395, 0
  %v1400 = vsel %vm149, %v1387, 0
  %v1403 = vsel %vm149, %v1388, 0
  %1405 = vmatpush.msra.mxu0 0.0
  %1406 = vmatpush.msra.mxu0 0.0
  %1407 = vmatpush.msra.mxu0 0.0
  %1408 = vmatpush.msra.mxu0 0.0
  %1409 = vmatpush.msra.mxu0 0.0
  %1410 = vmatpush.msra.mxu0 0.0
  %1411 = vmatpush.msra.mxu0 0.0
  %1412 = vmatpush.msra.mxu0 0.0
  %1413 = vmatpush.msra.mxu0 0.0
  %1414 = vmatpush.msra.mxu0 0.0
  %1415 = vmatpush.msra.mxu0 0.0
  %1416 = vmatpush.msra.mxu0 0.0
  %1417 = vmatpush.msra.mxu0 %v1393
  %1418 = vmatpush.msra.mxu0 %v1392
  %1419 = vmatpush.msra.mxu0 %v1391
  %1420 = vmatpush.msra.mxu0 %v1390
  %1421 = vmatmul.f32.gmra.mxu0 %v1400
  %v1422 = vpop.f32.mrf.mxu0
  %v1423 = vadd.f32 %v1397, %v1422
  %1424 = vmatmul.f32.gmra.mxu0 %v1403
  %v1425 = vpop.f32.mrf.mxu0
  %v1426 = vadd.f32 %v1397, %v1425
  %1427 = vdwg.mxu0
  %v1428 = vmul.f32 %v1423, 0.5
  %v1429 = vmul.f32 %v1426, 0.5
  %v1430 = vmul.f32 %v1423, 0.044715
  %v1431 = vmul.f32 %v1426, 0.044715
  %v1432 = vmul.f32 %v1430, %v1423
  %v1433 = vmul.f32 %v1431, %v1426
  %v1434 = vmul.f32 %v1432, %v1423
  %v1435 = vmul.f32 %v1433, %v1426
  %v1436 = vadd.f32 %v1423, %v1434
  %v1437 = vadd.f32 %v1426, %v1435
  %v1438 = vmul.f32 %v1436, 0.7978846
  %v1439 = vmul.f32 %v1437, 0.7978846
  %v1440 = vtanh.pop %v1438
  %v1441 = vtanh.pop %v1439
  %v1442 = vadd.f32 %v1440, 1.0
  %v1443 = vadd.f32 %v1441, 1.0
  %v1444 = vmul.f32 %v1428, %v1442
  %v1445 = vmul.f32 %v1429, %v1443
  %s1446 = scalar_lea.vmem %s19, 64
  %v1447 = vld [vmem:[%s1446] sm:$0xff]
  %v1448 = vld [vmem:[%s1446 + $0x8] sm:$0xff]
  %v1449 = vld [vmem:[%s1446 + $0x10] sm:$0xff]
  %v1450 = vld [vmem:[%s1446 + $0x18] sm:$0xff]
  %v1451 = vld [vmem:[%s1446 + $0x20] sm:$0xff]
  %v1452 = vld [vmem:[%s1446 + $0x28] sm:$0xff]
  %v1453 = vld [vmem:[%s1446 + $0x30] sm:$0xff]
  %v1454 = vld [vmem:[%s1446 + $0x38] sm:$0xff]
  %s1455 = scalar_lea.vmem %s20, 1
  %v1456 = vld [vmem:[%s1455] sm:$0x1]
  %v1458 = vperm.slane %v1456, 0
  %v1461 = vsel %vm786, %v1444, 0
  %v1464 = vsel %vm786, %v1445, 0
  %1466 = vmatpush.msra.mxu0 0.0
  %1467 = vmatpush.msra.mxu0 0.0
  %1468 = vmatpush.msra.mxu0 0.0
  %1469 = vmatpush.msra.mxu0 0.0
  %1470 = vmatpush.msra.mxu0 0.0
  %1471 = vmatpush.msra.mxu0 0.0
  %1472 = vmatpush.msra.mxu0 0.0
  %1473 = vmatpush.msra.mxu0 0.0
  %1474 = vmatpush.msra.mxu0 %v1454
  %1475 = vmatpush.msra.mxu0 %v1453
  %1476 = vmatpush.msra.mxu0 %v1452
  %1477 = vmatpush.msra.mxu0 %v1451
  %1478 = vmatpush.msra.mxu0 %v1450
  %1479 = vmatpush.msra.mxu0 %v1449
  %1480 = vmatpush.msra.mxu0 %v1448
  %1481 = vmatpush.msra.mxu0 %v1447
  %1482 = vmatmul.f32.gmra.mxu0 %v1461
  %v1483 = vpop.f32.mrf.mxu0
  %v1484 = vadd.f32 %v1458, %v1483
  %1485 = vmatmul.f32.gmra.mxu0 %v1464
  %v1486 = vpop.f32.mrf.mxu0
  %v1487 = vadd.f32 %v1458, %v1486
  %1488 = vdwg.mxu0
  %v1489 = vadd.f32 %v1484, %v1387
  %v1490 = vadd.f32 %v1487, %v1388
  %s1491 = scalar_lea.vmem %s21, 1
  %v1492 = vld [vmem:[%s1491] sm:$0x1]
  %s1493 = scalar_lea.vmem %s22, 1
  %v1494 = vld [vmem:[%s1493] sm:$0x1]
  %v1495 = vsel %vm149, %v1489, 0.0
  %1496 = vadd.xlane.f32.xlu0 %v1495
  %v1497 = vpop.xlane.xlu0 %1496
  %v1498 = vsel %vm149, %v1490, 0.0
  %1499 = vadd.xlane.f32.xlu0 %v1498
  %v1500 = vpop.xlane.xlu0 %1499
  %v1501 = vmul.f32 %v1497, %v162
  %v1502 = vmul.f32 %v1500, %v162
  %v1503 = vmul.f32 %v1489, %v1489
  %v1504 = vmul.f32 %v1490, %v1490
  %v1505 = vsel %vm149, %v1503, 0.0
  %1506 = vadd.xlane.f32.xlu0 %v1505
  %v1507 = vpop.xlane.xlu0 %1506
  %v1508 = vsel %vm149, %v1504, 0.0
  %1509 = vadd.xlane.f32.xlu0 %v1508
  %v1510 = vpop.xlane.xlu0 %1509
  %v1511 = vmul.f32 %v1507, %v162
  %v1512 = vmul.f32 %v1510, %v162
  %v1513 = vmul.f32 %v1501, %v1501
  %v1514 = vmul.f32 %v1502, %v1502
  %v1515 = vsub.f32 %v1511, %v1513
  %v1516 = vsub.f32 %v1512, %v1514
  %v1517 = vsub.f32 %v1489, %v1501
  %v1518 = vsub.f32 %v1490, %v1502
  %v1519 = vadd.f32 %v1515, 1e-12
  %v1520 = vadd.f32 %v1516, 1e-12
  %v1521 = vrsqrt.pop %v1519
  %v1522 = vmul.f32 %v1521, %v1519
  %v1523 = vmul.f32 %v1522, %v1521
  %v1524 = vmul.f32 0.5, %v1523
  %v1525 = vsub.f32 1.5, %v1524
  %v1526 = vmul.f32 %v1521, %v1525
  %vm1527 = vweird.f32 %v1519
  %vm1528 = vweird.f32 %v1521
  %vm1529 = vmor %vm1527, %vm1528
  %v1530 = vsel %vm1529, %v1521, %v1526
  %v1531 = vrsqrt.pop %v1520
  %v1532 = vmul.f32 %v1531, %v1520
  %v1533 = vmul.f32 %v1532, %v1531
  %v1534 = vmul.f32 0.5, %v1533
  %v1535 = vsub.f32 1.5, %v1534
  %v1536 = vmul.f32 %v1531, %v1535
  %vm1537 = vweird.f32 %v1520
  %vm1538 = vweird.f32 %v1531
  %vm1539 = vmor %vm1537, %vm1538
  %v1540 = vsel %vm1539, %v1531, %v1536
  %v1541 = vmul.f32 %v1517, %v1530
  %v1542 = vmul.f32 %v1518, %v1540
  %v1544 = vperm.slane %v1492, 0
  %v1546 = vmul.f32 %v1541, %v1544
  %v1547 = vmul.f32 %v1542, %v1544
  %v1549 = vperm.slane %v1494, 0
  %v1551 = vadd.f32 %v1546, %v1549
  %v1552 = vadd.f32 %v1547, %v1549
  %v1553 = vld [vmem:[%s23] sm:$0xff]
  %v1555 = vsel %vm316, %v1553, 0
  %1557 = vmatpush.msra.mxu0 0.0
  %1558 = vmatpush.msra.mxu0 0.0
  %1559 = vmatpush.msra.mxu0 0.0
  %1560 = vmatpush.msra.mxu0 0.0
  %1561 = vmatpush.msra.mxu0 0.0
  %1562 = vmatpush.msra.mxu0 0.0
  %1563 = vmatpush.msra.mxu0 0.0
  %1564 = vmatpush.msra.mxu0 0.0
  %1565 = vmatpush.msra.mxu0 0.0
  %1566 = vmatpush.msra.mxu0 0.0
  %1567 = vmatpush.msra.mxu0 0.0
  %1568 = vmatpush.msra.mxu0 0.0
  %1569 = vmatpush.msra.mxu0 0.0
  %1570 = vmatpush.msra.mxu0 0.0
  %1571 = vmatpush.msra.mxu0 %v1552
  %1572 = vmatpush.msra.mxu0 %v1551
  %1573 = vmatmul.f32.gmra.mxu0 %v1555
  %v1574 = vpop.f32.mrf.mxu0
  %v1575 = vadd.f32 0.0, %v1574
  %1576 = vdwg.mxu0
  %v1577 = vld [vmem:[%s24] sm:$0xff]
  %v1578 = vld [vmem:[%s24 + $0x8] sm:$0xff]
  %v1579 = vld [vmem:[%s24 + $0x10] sm:$0xff]
  %v1580 = vld [vmem:[%s24 + $0x18] sm:$0xff]
  %v1581 = vld [vmem:[%s25] sm:$0x1]
  %v1583 = vperm.slane %v1581, 0
  %v1586 = vsel %vm149, %v1575, 0
  %1588 = vmatpush.msra.mxu0 0.0
  %1589 = vmatpush.msra.mxu0 0.0
  %1590 = vmatpush.msra.mxu0 0.0
  %1591 = vmatpush.msra.mxu0 0.0
  %1592 = vmatpush.msra.mxu0 0.0
  %1593 = vmatpush.msra.mxu0 0.0
  %1594 = vmatpush.msra.mxu0 0.0
  %1595 = vmatpush.msra.mxu0 0.0
  %1596 = vmatpush.msra.mxu0 0.0
  %1597 = vmatpush.msra.mxu0 0.0
  %1598 = vmatpush.msra.mxu0 0.0
  %1599 = vmatpush.msra.mxu0 0.0
  %1600 = vmatpush.msra.mxu0 %v1580
  %1601 = vmatpush.msra.mxu0 %v1579
  %1602 = vmatpush.msra.mxu0 %v1578
  %1603 = vmatpush.msra.mxu0 %v1577
  %1604 = vmatmul.f32.gmra.mxu0 %v1586
  %v1605 = vpop.f32.mrf.mxu0
  %v1606 = vadd.f32 %v1583, %v1605
  %1607 = vdwg.mxu0
  %v1608 = vtanh.pop %v1606
  %v1609 = vld [vmem:[%s26] sm:$0xff]
  %v1610 = vld [vmem:[%s26 + $0x8] sm:$0xff]
  %v1611 = vld [vmem:[%s26 + $0x10] sm:$0xff]
  %v1612 = vld [vmem:[%s26 + $0x18] sm:$0xff]
  %v1613 = vld [vmem:[%s27] sm:$0x1]
  %v1615 = vperm.slane %v1613, 0
  %v1618 = vsel %vm149, %v1608, 0
  %1620 = vmatpush.msra.mxu0 0.0
  %1621 = vmatpush.msra.mxu0 0.0
  %1622 = vmatpush.msra.mxu0 0.0
  %1623 = vmatpush.msra.mxu0 0.0
  %1624 = vmatpush.msra.mxu0 0.0
  %1625 = vmatpush.msra.mxu0 0.0
  %1626 = vmatpush.msra.mxu0 0.0
  %1627 = vmatpush.msra.mxu0 0.0
  %1628 = vmatpush.msra.mxu0 0.0
  %1629 = vmatpush.msra.mxu0 0.0
  %1630 = vmatpush.msra.mxu0 0.0
  %1631 = vmatpush.msra.mxu0 0.0
  %1632 = vmatpush.msra.mxu0 %v1612
  %1633 = vmatpush.msra.mxu0 %v1611
  %1634 = vmatpush.msra.mxu0 %v1610
  %1635 = vmatpush.msra.mxu0 %v1609
  %1636 = vmatmul.f32.gmra.mxu0 %v1618
  %v1637 = vpop.f32.mrf.mxu0
  %v1638 = vadd.f32 %v1615, %v1637
  %1639 = vdwg.mxu0
  %1640 = vst [vmem:[%s28] sm:$0xff] %v1638
  // Predicated region
  $region114: #{transformer_lstm_forward.1} parent=0 // pred_check
    _
  $region115: #{transformer_lstm_forward.1} parent=0 // pred_check_branch
    %1642 = sbr.rel (0) target = $region117
  $region116: #{transformer_lstm_forward.1} parent=0 // pred_region
    _
  $region117: #{transformer_lstm_forward.1} parent=0 // pred_fallthru
    _
  // Predicated region
  $region118: #{transformer_lstm_forward.1} parent=0 // pred_check
    _
  $region119: #{transformer_lstm_forward.1} parent=0 // pred_check_branch
    %1644 = sbr.rel (0) target = $region121
  $region120: #{transformer_lstm_forward.1} parent=0 // pred_region
    _
  $region121: #{transformer_lstm_forward.1} parent=0 // pred_fallthru
    _

</llo_original>
